<compile_context>
chip_gen: v7x
topology: tpu7x:2x2x1
jax: 0.10.0
libtpu: 0.0.40
codegen_flags: <defaults>
</compile_context>

<pallas_src>
import jax
import jax.numpy as jnp
from jax import lax
from jax.experimental import pallas as pl
from jax.experimental.pallas import tpu as pltpu


def _round_up(x, m):
    return ((x + m - 1) // m) * m


def _vmem_capacity_bytes():
    """Physical VMEM per core (128 MiB v5e/v6e, 64 MiB v7x); conservative fallback."""
    try:
        info = pltpu.get_tpu_info()
        cap = getattr(info, "vmem_capacity_bytes", None)
        if cap:
            return int(cap)
    except Exception:
        pass
    return 64 * 1024 * 1024


def _auto_batch_blocks():
    """2 batch blocks on chips with 2 TensorCores of parallelism (v4/v5p/v7x), else 1."""
    try:
        kind = jax.devices()[0].device_kind.lower()
    except Exception:
        return 1
    return 2 if any(tag in kind for tag in ("v4", "v5p", "v7", "7x")) else 1


def _make_lstm_kernel(chunk_T, rem, num_chunks, unroll):
    """Kernel factory closing over static ints (chunk_T, tail length, #chunks)."""

    def kernel(gx_ref, whh_ref, h0_ref, c0_ref, hall_ref, h_ref, c_ref):
        # gx_ref  : (chunk_T, Bb, 4Hp) f32  precomputed x-projection (+bias), pre-scaled
        # whh_ref : (Hp, 4Hp)          bf16 W_hh^T, whole array, single VMEM copy
        # h0/c0   : (Bb, Hp)           f32  initial state for this batch block
        # hall_ref: (chunk_T, Bb, Hp)  f32  h_t for every step of this chunk
        # h_ref/c_ref: (Bb, Hp)        f32  state carry across chunks (resident outputs)
        chunk = pl.program_id(1)
        Hp = h_ref.shape[-1]

        @pl.when(chunk == 0)
        def _init():
            h_ref[...] = h0_ref[...]
            c_ref[...] = c0_ref[...]

        whh = whh_ref[...]          # hoisted: loaded once per grid step, reused every t

        def step(t, carry):
            h, c = carry
            gx = gx_ref[t]                                           # (Bb, 4Hp) f32
            # bf16 x bf16 -> f32 accumulate: MXU fast path on the serial critical path.
            gates = gx + jnp.dot(h.astype(jnp.bfloat16), whh,
                                 preferred_element_type=jnp.float32)
            # One tanh over all four gates; i/f/o inputs were pre-scaled by 0.5,
            # so sigmoid(a) = 0.5 + 0.5 * tanh(a/2) needs only the affine below.
            tg = jnp.tanh(gates)
            i = 0.5 + 0.5 * tg[:, 0 * Hp:1 * Hp]
            f = 0.5 + 0.5 * tg[:, 1 * Hp:2 * Hp]
            g = tg[:, 2 * Hp:3 * Hp]
            o = 0.5 + 0.5 * tg[:, 3 * Hp:4 * Hp]
            c_new = f * c + i * g
            h_new = o * jnp.tanh(c_new)
            hall_ref[t] = h_new
            return h_new, c_new

        def run(n_steps):                       # n_steps is a static Python int
            h, c = lax.fori_loop(0, n_steps, step, (h_ref[...], c_ref[...]),
                                 unroll=min(unroll, n_steps))
            h_ref[...] = h
            c_ref[...] = c

        if rem == 0:                            # every chunk is full: one unmasked loop
            run(chunk_T)
        else:                                   # static-size tail chunk: no per-step masks
            @pl.when(chunk < num_chunks - 1)
            def _full():
                run(chunk_T)

            @pl.when(chunk == num_chunks - 1)
            def _tail():
                run(rem)

    return kernel


def vanilla_lstm_forward(measurements, params, hidden_hc=None, *,
                         batch_blocks=None, chunk_T_cap=None):
    """measurements: (B, T, D_in) float32.  Returns (output_states, (h_n, c_n))."""
    B, T, Din = measurements.shape
    H = params["w_hh"].shape[1]                      # w_hh: (4H, H)
    target_dim = params["w_out"].shape[0]            # w_out: (target, H)

    Hp = _round_up(H, 128)                           # lane-align each gate slice
    G = 4 * Hp
    Bp = _round_up(B, 8)                             # sublane-align the batch (f32)

    # Optional batch-block parallel axis (only useful on 2-TensorCore chips).
    if batch_blocks is None:
        batch_blocks = _auto_batch_blocks()
    batch_blocks = max(1, int(batch_blocks))
    if Bp % batch_blocks != 0 or (Bp // batch_blocks) % 8 != 0:
        batch_blocks = 1
    Bb = Bp // batch_blocks

    # Fold the 0.5 pre-scale for sigmoid-gates (i, f, o) into weights/bias.
    scale = jnp.array([0.5, 0.5, 1.0, 0.5], jnp.float32)

    def pad_gate_cols(w):   # (rows, 4H) -> (rows, 4Hp), gate-blocked, scaled, zero-padded
        rows = w.shape[0]
        w = w.reshape(rows, 4, H).astype(jnp.float32) * scale[None, :, None]
        w = jnp.pad(w, ((0, 0), (0, 0), (0, Hp - H)))
        return w.reshape(rows, G)

    wih_t = pad_gate_cols(jnp.transpose(params["w_ih"], (1, 0)))            # (Din, 4Hp)
    whh_t = pad_gate_cols(jnp.transpose(params["w_hh"], (1, 0)))            # (H, 4Hp)
    whh_t = jnp.pad(whh_t, ((0, Hp - H), (0, 0))).astype(jnp.bfloat16)      # (Hp, 4Hp) bf16
    bias = (params["b_ih"] + params["b_hh"]).reshape(1, 4, H).astype(jnp.float32)
    bias = bias * scale[None, :, None]
    bias = jnp.pad(bias, ((0, 0), (0, 0), (0, Hp - H))).reshape(1, 1, G)    # (1, 1, 4Hp)

    # Input projection hoisted out of the recurrence: one big matmul.
    x_tbd = jnp.transpose(measurements, (1, 0, 2)).astype(jnp.float32)      # (T, B, Din)
    gates_x = jnp.einsum('tbd,dg->tbg', x_tbd, wih_t,
                         preferred_element_type=jnp.float32) + bias         # (T, B, 4Hp)
    if Bp != B:
        gates_x = jnp.pad(gates_x, ((0, 0), (0, Bp - B), (0, 0)))           # zero rows stay zero

    # --- Chunk sizing from a real VMEM budget -----------------------------------
    vmem_cap = _vmem_capacity_bytes()
    budget = int(vmem_cap * 0.6)                     # headroom for temps / regalloc
    whh_bytes = Hp * G * 2                           # bf16 weight, single VMEM copy
    state_blk = Bb * Hp * 4
    fixed = whh_bytes + 4 * state_blk + 4 * state_blk   # h0/c0 (dbl-buf) + h/c carries (dbl-buf)
    per_step = 2 * Bb * G * 4 + 2 * Bb * Hp * 4          # gates_x in + h_all out, double-buffered
    cap = 256 if vmem_cap >= (100 << 20) else 128         # smaller cap on 64 MiB VMEM (v7x)
    if chunk_T_cap is not None:
        cap = min(cap, int(chunk_T_cap))
    chunk_T = max(1, min(T, (budget - fixed) // per_step, cap))
    num_chunks = int(pl.cdiv(T, chunk_T))
    Tp = num_chunks * chunk_T
    rem = T % chunk_T                                 # 0 -> all chunks full
    if Tp != T:
        gates_x = jnp.pad(gates_x, ((0, Tp - T), (0, 0), (0, 0)))
    vmem_limit = int(min(vmem_cap, max(fixed + chunk_T * per_step + (8 << 20), 32 << 20)))

    # Initial state (PyTorch: None -> zeros; otherwise (h0, c0) each (1, B, H)).
    if hidden_hc is None:
        h0 = jnp.zeros((Bp, Hp), jnp.float32)
        c0 = jnp.zeros((Bp, Hp), jnp.float32)
    else:
        h0_in, c0_in = hidden_hc
        h0 = jnp.pad(jnp.asarray(h0_in, jnp.float32).reshape(B, H),
                     ((0, Bp - B), (0, Hp - H)))
        c0 = jnp.pad(jnp.asarray(c0_in, jnp.float32).reshape(B, H),
                     ((0, Bp - B), (0, Hp - H)))

    kernel = _make_lstm_kernel(chunk_T, rem, num_chunks, unroll=8)

    grid_spec = pltpu.PrefetchScalarGridSpec(
        num_scalar_prefetch=0,
        grid=(batch_blocks, num_chunks),
        in_specs=[
            pl.BlockSpec((chunk_T, Bb, G), lambda b, c: (c, b, 0)),   # gates_x chunk
            pl.BlockSpec(memory_space=pltpu.MemorySpace.VMEM),        # W_hh^T: whole array, single buffer
            pl.BlockSpec((Bb, Hp), lambda b, c: (b, 0)),              # h0 block
            pl.BlockSpec((Bb, Hp), lambda b, c: (b, 0)),              # c0 block
        ],
        out_specs=[
            pl.BlockSpec((chunk_T, Bb, Hp), lambda b, c: (c, b, 0)),  # h_t for all steps
            pl.BlockSpec((Bb, Hp), lambda b, c: (b, 0)),              # h carry
            pl.BlockSpec((Bb, Hp), lambda b, c: (b, 0)),              # c carry
        ],
    )

    h_all, h_n, c_n = pl.pallas_call(
        kernel,
        out_shape=(
            jax.ShapeDtypeStruct((Tp, Bp, Hp), jnp.float32),
            jax.ShapeDtypeStruct((Bp, Hp), jnp.float32),
            jax.ShapeDtypeStruct((Bp, Hp), jnp.float32),
        ),
        grid_spec=grid_spec,
        compiler_params=pltpu.CompilerParams(
            dimension_semantics=("parallel", "arbitrary"),   # batch blocks ||, time serial
            vmem_limit_bytes=vmem_limit),
    )(gates_x, whh_t, h0, c0)

    # Output head hoisted out of the recurrence: one big matmul.  Keep Hp lanes and
    # zero-pad w_out instead of lane-slicing h_all (padded h lanes are exact zeros).
    wout_t = jnp.pad(jnp.transpose(params["w_out"], (1, 0)).astype(jnp.float32),
                     ((0, Hp - H), (0, 0)))                            # (Hp, target)
    y = (jnp.einsum('tbh,ho->tbo', h_all[:T], wout_t,
                    preferred_element_type=jnp.float32)
         + params["b_out"].reshape(1, 1, target_dim))                  # (T, Bp, target)

    # (T, Bp, target) -> (B, T*target, 1)   (matches .view(batch_size, -1, 1))
    output_states = jnp.transpose(y, (1, 0, 2))[:B].reshape(B, -1, 1)
    h_n = h_n[:B, :H][None, ...]                                       # (1, B, H)
    c_n = c_n[:B, :H][None, ...]
    return output_states, (h_n, c_n)


def init_params(key, input_dim, hidden_dim, target_dim):
    """Deterministic PyTorch-style uniform(-1/sqrt(H), 1/sqrt(H)) init."""
    ks = jax.random.split(key, 6)
    bound = 1.0 / jnp.sqrt(hidden_dim)
    u = lambda k, shape: jax.random.uniform(k, shape, jnp.float32, -bound, bound)
    return {
        "w_ih": u(ks[0], (4 * hidden_dim, input_dim)),
        "w_hh": u(ks[1], (4 * hidden_dim, hidden_dim)),
        "b_ih": u(ks[2], (4 * hidden_dim,)),
        "b_hh": u(ks[3], (4 * hidden_dim,)),
        "w_out": u(ks[4], (target_dim, hidden_dim)),
        "b_out": u(ks[5], (target_dim,)),
    }


def _reference_forward(measurements, params, h0c0=None):
    """Plain-JAX f32 reference (same math as torch.nn.LSTM + Linear)."""
    B, T, Din = measurements.shape
    H = params["w_hh"].shape[1]

    def step(carry, x_t):
        h, c = carry
        gates = (x_t @ params["w_ih"].T + params["b_ih"]
                 + h @ params["w_hh"].T + params["b_hh"])
        i, f, g, o = jnp.split(gates, 4, axis=-1)
        c = jax.nn.sigmoid(f) * c + jax.nn.sigmoid(i) * jnp.tanh(g)
        h = jax.nn.sigmoid(o) * jnp.tanh(c)
        return (h, c), h

    if h0c0 is None:
        h0 = jnp.zeros((B, H), jnp.float32)
        c0 = jnp.zeros((B, H), jnp.float32)
    else:
        h0, c0 = h0c0
    (h_f, c_f), hs = lax.scan(step, (h0, c0), jnp.transpose(measurements, (1, 0, 2)))
    y = hs @ params["w_out"].T + params["b_out"]
    return jnp.transpose(y, (1, 0, 2)).reshape(B, -1, 1), h_f, c_f


if __name__ == "__main__":
    B, T, INPUT_DIM, HIDDEN_DIM, TARGET_DIM = 2, 8, 4, 32, 1

    key = jax.random.PRNGKey(0)
    k_params, k_x, k_x2 = jax.random.split(key, 3)
    params = init_params(k_params, INPUT_DIM, HIDDEN_DIM, TARGET_DIM)
    measurements = jax.random.normal(k_x, (B, T, INPUT_DIM), jnp.float32)

    # bf16 recurrence matmul is a deliberate speed/accuracy trade-off -> relaxed tol.
    TOL = dict(atol=2e-2, rtol=2e-2)

    output_states, (h_n, c_n) = vanilla_lstm_forward(measurements, params)
    jax.block_until_ready((output_states, h_n, c_n))

    assert output_states.shape == (B, T * TARGET_DIM, 1)
    assert h_n.shape == (1, B, HIDDEN_DIM) and c_n.shape == (1, B, HIDDEN_DIM)

    ref_y, ref_h, ref_c = _reference_forward(measurements, params)
    assert jnp.allclose(output_states, ref_y, **TOL)
    assert jnp.allclose(h_n[0], ref_h, **TOL)
    assert jnp.allclose(c_n[0], ref_c, **TOL)

    # Explicit initial-state path (same h0/c0 fed to kernel and reference).
    out2, (h2, c2) = vanilla_lstm_forward(measurements, params,
                                          (ref_h[None], ref_c[None]))
    jax.block_until_ready((out2, h2, c2))
    ref_y2, ref_h2, ref_c2 = _reference_forward(measurements, params, (ref_h, ref_c))
    assert jnp.allclose(out2, ref_y2, **TOL)
    assert jnp.allclose(h2[0], ref_h2, **TOL)
    assert jnp.allclose(c2[0], ref_c2, **TOL)

    # Exercise the multi-chunk + static-tail path and the batch-blocked grid path.
    B3, T3 = 16, 11
    x3 = jax.random.normal(k_x2, (B3, T3, INPUT_DIM), jnp.float32)
    out3, (h3, c3) = vanilla_lstm_forward(x3, params, batch_blocks=2, chunk_T_cap=4)
    jax.block_until_ready((out3, h3, c3))
    ref_y3, ref_h3, ref_c3 = _reference_forward(x3, params)
    assert out3.shape == (B3, T3 * TARGET_DIM, 1)
    assert jnp.allclose(out3, ref_y3, **TOL)
    assert jnp.allclose(h3[0], ref_h3, **TOL)
    assert jnp.allclose(c3[0], ref_c3, **TOL)

    print("KERNEL_OK")
</pallas_src>

<mosaic_0001>
module attributes {stable_mosaic.version = 11 : i64} {
  func.func @kernel(%arg0: i32, %arg1: i32, %arg2: memref<8x8x512xf32, #tpu.memory_space<vmem>>, %arg3: memref<128x512xbf16, #tpu.memory_space<vmem>>, %arg4: memref<8x128xf32, #tpu.memory_space<vmem>>, %arg5: memref<8x128xf32, #tpu.memory_space<vmem>>, %arg6: memref<8x8x128xf32, #tpu.memory_space<vmem>>, %arg7: memref<8x128xf32, #tpu.memory_space<vmem>>, %arg8: memref<8x128xf32, #tpu.memory_space<vmem>>) attributes {dimension_semantics = [#tpu.dimension_semantics<parallel>, #tpu.dimension_semantics<arbitrary>], iteration_bounds = array<i64: 1, 1>, scalar_prefetch = 0 : i64, scratch_operands = 0 : i64, tpu.core_type = #tpu.core_type<tc>, window_params = [{transform_indices = @transform_0, window_bounds = array<i64: 8, 8, 512>}, {pipeline_mode = #tpu.pipeline_mode<synchronous>, transform_indices = @transform_1, window_bounds = array<i64: 128, 512>}, {transform_indices = @transform_2, window_bounds = array<i64: 8, 128>}, {transform_indices = @transform_3, window_bounds = array<i64: 8, 128>}, {transform_indices = @transform_4, window_bounds = array<i64: 8, 8, 128>}, {transform_indices = @transform_5, window_bounds = array<i64: 8, 128>}, {transform_indices = @transform_6, window_bounds = array<i64: 8, 128>}]} {
    %c0_i32 = arith.constant 0 : i32
    %0 = arith.cmpi eq, %arg1, %c0_i32 : i32
    %1 = arith.extui %0 : i1 to i32
    %c0_i32_0 = arith.constant 0 : i32
    %2 = arith.cmpi ne, %1, %c0_i32_0 : i32
    scf.if %2 {
      %c0_98 = arith.constant 0 : index
      %c0_99 = arith.constant 0 : index
      %264 = vector.load %arg4[%c0_98, %c0_99] : memref<8x128xf32, #tpu.memory_space<vmem>>, vector<8x128xf32>
      %c0_100 = arith.constant 0 : index
      %c0_101 = arith.constant 0 : index
      %265 = vector.load %arg7[%c0_100, %c0_101] : memref<8x128xf32, #tpu.memory_space<vmem>>, vector<8x128xf32>
      tpu.vector_store %arg7[%c0_100, %c0_101], %264 {strides = array<i32>} : memref<8x128xf32, #tpu.memory_space<vmem>>, vector<8x128xf32>,
      %c0_102 = arith.constant 0 : index
      %c0_103 = arith.constant 0 : index
      %266 = vector.load %arg5[%c0_102, %c0_103] : memref<8x128xf32, #tpu.memory_space<vmem>>, vector<8x128xf32>
      %c0_104 = arith.constant 0 : index
      %c0_105 = arith.constant 0 : index
      %267 = vector.load %arg8[%c0_104, %c0_105] : memref<8x128xf32, #tpu.memory_space<vmem>>, vector<8x128xf32>
      tpu.vector_store %arg8[%c0_104, %c0_105], %266 {strides = array<i32>} : memref<8x128xf32, #tpu.memory_space<vmem>>, vector<8x128xf32>,
    } else {
    }
    %c0 = arith.constant 0 : index
    %c0_1 = arith.constant 0 : index
    %3 = vector.load %arg3[%c0, %c0_1] : memref<128x512xbf16, #tpu.memory_space<vmem>>, vector<128x512xbf16>
    %c0_2 = arith.constant 0 : index
    %c0_3 = arith.constant 0 : index
    %4 = vector.load %arg7[%c0_2, %c0_3] : memref<8x128xf32, #tpu.memory_space<vmem>>, vector<8x128xf32>
    %c0_4 = arith.constant 0 : index
    %c0_5 = arith.constant 0 : index
    %5 = vector.load %arg8[%c0_4, %c0_5] : memref<8x128xf32, #tpu.memory_space<vmem>>, vector<8x128xf32>
    %c0_i32_6 = arith.constant 0 : i32
    %6 = arith.index_cast %c0_i32_6 : i32 to index
    %c0_7 = arith.constant 0 : index
    %c0_8 = arith.constant 0 : index
    %7 = vector.load %arg2[%6, %c0_7, %c0_8] : memref<8x8x512xf32, #tpu.memory_space<vmem>>, vector<1x8x512xf32>
    %8 = vector.shape_cast %7 : vector<1x8x512xf32> to vector<8x512xf32>
    %9 = arith.truncf %4 : vector<8x128xf32> to vector<8x128xbf16>
    %cst = arith.constant dense<0.000000e+00> : vector<8x512xf32>
    %10 = tpu.matmul %9, %3, %cst {dimension_numbers = #tpu.dot_dimension_numbers<[1], [0], [0], [1], [0, 0, 1, 1], [], []>} : vector<8x128xbf16>, vector<128x512xbf16>, vector<8x512xf32> -> vector<8x512xf32>
    %11 = arith.addf %8, %10 : vector<8x512xf32>
    %12 = math.tanh %11 : vector<8x512xf32>
    %13 = vector.extract_strided_slice %12 {offsets = [0, 0], sizes = [8, 128], strides = [1, 1]} : vector<8x512xf32> to vector<8x128xf32>
    %cst_9 = arith.constant 5.000000e-01 : f32
    %14 = vector.broadcast %cst_9 : f32 to vector<8x128xf32>
    %15 = arith.mulf %14, %13 : vector<8x128xf32>
    %cst_10 = arith.constant 5.000000e-01 : f32
    %16 = vector.broadcast %cst_10 : f32 to vector<8x128xf32>
    %17 = arith.addf %16, %15 : vector<8x128xf32>
    %18 = vector.extract_strided_slice %12 {offsets = [0, 128], sizes = [8, 128], strides = [1, 1]} : vector<8x512xf32> to vector<8x128xf32>
    %cst_11 = arith.constant 5.000000e-01 : f32
    %19 = vector.broadcast %cst_11 : f32 to vector<8x128xf32>
    %20 = arith.mulf %19, %18 : vector<8x128xf32>
    %cst_12 = arith.constant 5.000000e-01 : f32
    %21 = vector.broadcast %cst_12 : f32 to vector<8x128xf32>
    %22 = arith.addf %21, %20 : vector<8x128xf32>
    %23 = vector.extract_strided_slice %12 {offsets = [0, 256], sizes = [8, 128], strides = [1, 1]} : vector<8x512xf32> to vector<8x128xf32>
    %24 = vector.extract_strided_slice %12 {offsets = [0, 384], sizes = [8, 128], strides = [1, 1]} : vector<8x512xf32> to vector<8x128xf32>
    %cst_13 = arith.constant 5.000000e-01 : f32
    %25 = vector.broadcast %cst_13 : f32 to vector<8x128xf32>
    %26 = arith.mulf %25, %24 : vector<8x128xf32>
    %cst_14 = arith.constant 5.000000e-01 : f32
    %27 = vector.broadcast %cst_14 : f32 to vector<8x128xf32>
    %28 = arith.addf %27, %26 : vector<8x128xf32>
    %29 = arith.mulf %22, %5 : vector<8x128xf32>
    %30 = arith.mulf %17, %23 : vector<8x128xf32>
    %31 = arith.addf %29, %30 : vector<8x128xf32>
    %32 = math.tanh %31 : vector<8x128xf32>
    %33 = arith.mulf %28, %32 : vector<8x128xf32>
    %34 = arith.index_cast %c0_i32_6 : i32 to index
    %c0_15 = arith.constant 0 : index
    %c0_16 = arith.constant 0 : index
    %35 = vector.load %arg6[%34, %c0_15, %c0_16] : memref<8x8x128xf32, #tpu.memory_space<vmem>>, vector<1x8x128xf32>
    %36 = vector.shape_cast %35 : vector<1x8x128xf32> to vector<8x128xf32>
    %37 = vector.shape_cast %33 : vector<8x128xf32> to vector<1x8x128xf32>
    tpu.vector_store %arg6[%34, %c0_15, %c0_16], %37 {strides = array<i32>} : memref<8x8x128xf32, #tpu.memory_space<vmem>>, vector<1x8x128xf32>,
    %c1_i32 = arith.constant 1 : i32
    %38 = arith.index_cast %c1_i32 : i32 to index
    %c0_17 = arith.constant 0 : index
    %c0_18 = arith.constant 0 : index
    %39 = vector.load %arg2[%38, %c0_17, %c0_18] : memref<8x8x512xf32, #tpu.memory_space<vmem>>, vector<1x8x512xf32>
    %40 = vector.shape_cast %39 : vector<1x8x512xf32> to vector<8x512xf32>
    %41 = arith.truncf %33 : vector<8x128xf32> to vector<8x128xbf16>
    %cst_19 = arith.constant dense<0.000000e+00> : vector<8x512xf32>
    %42 = tpu.matmul %41, %3, %cst_19 {dimension_numbers = #tpu.dot_dimension_numbers<[1], [0], [0], [1], [0, 0, 1, 1], [], []>} : vector<8x128xbf16>, vector<128x512xbf16>, vector<8x512xf32> -> vector<8x512xf32>
    %43 = arith.addf %40, %42 : vector<8x512xf32>
    %44 = math.tanh %43 : vector<8x512xf32>
    %45 = vector.extract_strided_slice %44 {offsets = [0, 0], sizes = [8, 128], strides = [1, 1]} : vector<8x512xf32> to vector<8x128xf32>
    %cst_20 = arith.constant 5.000000e-01 : f32
    %46 = vector.broadcast %cst_20 : f32 to vector<8x128xf32>
    %47 = arith.mulf %46, %45 : vector<8x128xf32>
    %cst_21 = arith.constant 5.000000e-01 : f32
    %48 = vector.broadcast %cst_21 : f32 to vector<8x128xf32>
    %49 = arith.addf %48, %47 : vector<8x128xf32>
    %50 = vector.extract_strided_slice %44 {offsets = [0, 128], sizes = [8, 128], strides = [1, 1]} : vector<8x512xf32> to vector<8x128xf32>
    %cst_22 = arith.constant 5.000000e-01 : f32
    %51 = vector.broadcast %cst_22 : f32 to vector<8x128xf32>
    %52 = arith.mulf %51, %50 : vector<8x128xf32>
    %cst_23 = arith.constant 5.000000e-01 : f32
    %53 = vector.broadcast %cst_23 : f32 to vector<8x128xf32>
    %54 = arith.addf %53, %52 : vector<8x128xf32>
    %55 = vector.extract_strided_slice %44 {offsets = [0, 256], sizes = [8, 128], strides = [1, 1]} : vector<8x512xf32> to vector<8x128xf32>
    %56 = vector.extract_strided_slice %44 {offsets = [0, 384], sizes = [8, 128], strides = [1, 1]} : vector<8x512xf32> to vector<8x128xf32>
    %cst_24 = arith.constant 5.000000e-01 : f32
    %57 = vector.broadcast %cst_24 : f32 to vector<8x128xf32>
    %58 = arith.mulf %57, %56 : vector<8x128xf32>
    %cst_25 = arith.constant 5.000000e-01 : f32
    %59 = vector.broadcast %cst_25 : f32 to vector<8x128xf32>
    %60 = arith.addf %59, %58 : vector<8x128xf32>
    %61 = arith.mulf %54, %31 : vector<8x128xf32>
    %62 = arith.mulf %49, %55 : vector<8x128xf32>
    %63 = arith.addf %61, %62 : vector<8x128xf32>
    %64 = math.tanh %63 : vector<8x128xf32>
    %65 = arith.mulf %60, %64 : vector<8x128xf32>
    %66 = arith.index_cast %c1_i32 : i32 to index
    %c0_26 = arith.constant 0 : index
    %c0_27 = arith.constant 0 : index
    %67 = vector.load %arg6[%66, %c0_26, %c0_27] : memref<8x8x128xf32, #tpu.memory_space<vmem>>, vector<1x8x128xf32>
    %68 = vector.shape_cast %67 : vector<1x8x128xf32> to vector<8x128xf32>
    %69 = vector.shape_cast %65 : vector<8x128xf32> to vector<1x8x128xf32>
    tpu.vector_store %arg6[%66, %c0_26, %c0_27], %69 {strides = array<i32>} : memref<8x8x128xf32, #tpu.memory_space<vmem>>, vector<1x8x128xf32>,
    %c2_i32 = arith.constant 2 : i32
    %70 = arith.index_cast %c2_i32 : i32 to index
    %c0_28 = arith.constant 0 : index
    %c0_29 = arith.constant 0 : index
    %71 = vector.load %arg2[%70, %c0_28, %c0_29] : memref<8x8x512xf32, #tpu.memory_space<vmem>>, vector<1x8x512xf32>
    %72 = vector.shape_cast %71 : vector<1x8x512xf32> to vector<8x512xf32>
    %73 = arith.truncf %65 : vector<8x128xf32> to vector<8x128xbf16>
    %cst_30 = arith.constant dense<0.000000e+00> : vector<8x512xf32>
    %74 = tpu.matmul %73, %3, %cst_30 {dimension_numbers = #tpu.dot_dimension_numbers<[1], [0], [0], [1], [0, 0, 1, 1], [], []>} : vector<8x128xbf16>, vector<128x512xbf16>, vector<8x512xf32> -> vector<8x512xf32>
    %75 = arith.addf %72, %74 : vector<8x512xf32>
    %76 = math.tanh %75 : vector<8x512xf32>
    %77 = vector.extract_strided_slice %76 {offsets = [0, 0], sizes = [8, 128], strides = [1, 1]} : vector<8x512xf32> to vector<8x128xf32>
    %cst_31 = arith.constant 5.000000e-01 : f32
    %78 = vector.broadcast %cst_31 : f32 to vector<8x128xf32>
    %79 = arith.mulf %78, %77 : vector<8x128xf32>
    %cst_32 = arith.constant 5.000000e-01 : f32
    %80 = vector.broadcast %cst_32 : f32 to vector<8x128xf32>
    %81 = arith.addf %80, %79 : vector<8x128xf32>
    %82 = vector.extract_strided_slice %76 {offsets = [0, 128], sizes = [8, 128], strides = [1, 1]} : vector<8x512xf32> to vector<8x128xf32>
    %cst_33 = arith.constant 5.000000e-01 : f32
    %83 = vector.broadcast %cst_33 : f32 to vector<8x128xf32>
    %84 = arith.mulf %83, %82 : vector<8x128xf32>
    %cst_34 = arith.constant 5.000000e-01 : f32
    %85 = vector.broadcast %cst_34 : f32 to vector<8x128xf32>
    %86 = arith.addf %85, %84 : vector<8x128xf32>
    %87 = vector.extract_strided_slice %76 {offsets = [0, 256], sizes = [8, 128], strides = [1, 1]} : vector<8x512xf32> to vector<8x128xf32>
    %88 = vector.extract_strided_slice %76 {offsets = [0, 384], sizes = [8, 128], strides = [1, 1]} : vector<8x512xf32> to vector<8x128xf32>
    %cst_35 = arith.constant 5.000000e-01 : f32
    %89 = vector.broadcast %cst_35 : f32 to vector<8x128xf32>
    %90 = arith.mulf %89, %88 : vector<8x128xf32>
    %cst_36 = arith.constant 5.000000e-01 : f32
    %91 = vector.broadcast %cst_36 : f32 to vector<8x128xf32>
    %92 = arith.addf %91, %90 : vector<8x128xf32>
    %93 = arith.mulf %86, %63 : vector<8x128xf32>
    %94 = arith.mulf %81, %87 : vector<8x128xf32>
    %95 = arith.addf %93, %94 : vector<8x128xf32>
    %96 = math.tanh %95 : vector<8x128xf32>
    %97 = arith.mulf %92, %96 : vector<8x128xf32>
    %98 = arith.index_cast %c2_i32 : i32 to index
    %c0_37 = arith.constant 0 : index
    %c0_38 = arith.constant 0 : index
    %99 = vector.load %arg6[%98, %c0_37, %c0_38] : memref<8x8x128xf32, #tpu.memory_space<vmem>>, vector<1x8x128xf32>
    %100 = vector.shape_cast %99 : vector<1x8x128xf32> to vector<8x128xf32>
    %101 = vector.shape_cast %97 : vector<8x128xf32> to vector<1x8x128xf32>
    tpu.vector_store %arg6[%98, %c0_37, %c0_38], %101 {strides = array<i32>} : memref<8x8x128xf32, #tpu.memory_space<vmem>>, vector<1x8x128xf32>,
    %c3_i32 = arith.constant 3 : i32
    %102 = arith.index_cast %c3_i32 : i32 to index
    %c0_39 = arith.constant 0 : index
    %c0_40 = arith.constant 0 : index
    %103 = vector.load %arg2[%102, %c0_39, %c0_40] : memref<8x8x512xf32, #tpu.memory_space<vmem>>, vector<1x8x512xf32>
    %104 = vector.shape_cast %103 : vector<1x8x512xf32> to vector<8x512xf32>
    %105 = arith.truncf %97 : vector<8x128xf32> to vector<8x128xbf16>
    %cst_41 = arith.constant dense<0.000000e+00> : vector<8x512xf32>
    %106 = tpu.matmul %105, %3, %cst_41 {dimension_numbers = #tpu.dot_dimension_numbers<[1], [0], [0], [1], [0, 0, 1, 1], [], []>} : vector<8x128xbf16>, vector<128x512xbf16>, vector<8x512xf32> -> vector<8x512xf32>
    %107 = arith.addf %104, %106 : vector<8x512xf32>
    %108 = math.tanh %107 : vector<8x512xf32>
    %109 = vector.extract_strided_slice %108 {offsets = [0, 0], sizes = [8, 128], strides = [1, 1]} : vector<8x512xf32> to vector<8x128xf32>
    %cst_42 = arith.constant 5.000000e-01 : f32
    %110 = vector.broadcast %cst_42 : f32 to vector<8x128xf32>
    %111 = arith.mulf %110, %109 : vector<8x128xf32>
    %cst_43 = arith.constant 5.000000e-01 : f32
    %112 = vector.broadcast %cst_43 : f32 to vector<8x128xf32>
    %113 = arith.addf %112, %111 : vector<8x128xf32>
    %114 = vector.extract_strided_slice %108 {offsets = [0, 128], sizes = [8, 128], strides = [1, 1]} : vector<8x512xf32> to vector<8x128xf32>
    %cst_44 = arith.constant 5.000000e-01 : f32
    %115 = vector.broadcast %cst_44 : f32 to vector<8x128xf32>
    %116 = arith.mulf %115, %114 : vector<8x128xf32>
    %cst_45 = arith.constant 5.000000e-01 : f32
    %117 = vector.broadcast %cst_45 : f32 to vector<8x128xf32>
    %118 = arith.addf %117, %116 : vector<8x128xf32>
    %119 = vector.extract_strided_slice %108 {offsets = [0, 256], sizes = [8, 128], strides = [1, 1]} : vector<8x512xf32> to vector<8x128xf32>
    %120 = vector.extract_strided_slice %108 {offsets = [0, 384], sizes = [8, 128], strides = [1, 1]} : vector<8x512xf32> to vector<8x128xf32>
    %cst_46 = arith.constant 5.000000e-01 : f32
    %121 = vector.broadcast %cst_46 : f32 to vector<8x128xf32>
    %122 = arith.mulf %121, %120 : vector<8x128xf32>
    %cst_47 = arith.constant 5.000000e-01 : f32
    %123 = vector.broadcast %cst_47 : f32 to vector<8x128xf32>
    %124 = arith.addf %123, %122 : vector<8x128xf32>
    %125 = arith.mulf %118, %95 : vector<8x128xf32>
    %126 = arith.mulf %113, %119 : vector<8x128xf32>
    %127 = arith.addf %125, %126 : vector<8x128xf32>
    %128 = math.tanh %127 : vector<8x128xf32>
    %129 = arith.mulf %124, %128 : vector<8x128xf32>
    %130 = arith.index_cast %c3_i32 : i32 to index
    %c0_48 = arith.constant 0 : index
    %c0_49 = arith.constant 0 : index
    %131 = vector.load %arg6[%130, %c0_48, %c0_49] : memref<8x8x128xf32, #tpu.memory_space<vmem>>, vector<1x8x128xf32>
    %132 = vector.shape_cast %131 : vector<1x8x128xf32> to vector<8x128xf32>
    %133 = vector.shape_cast %129 : vector<8x128xf32> to vector<1x8x128xf32>
    tpu.vector_store %arg6[%130, %c0_48, %c0_49], %133 {strides = array<i32>} : memref<8x8x128xf32, #tpu.memory_space<vmem>>, vector<1x8x128xf32>,
    %c4_i32 = arith.constant 4 : i32
    %134 = arith.index_cast %c4_i32 : i32 to index
    %c0_50 = arith.constant 0 : index
    %c0_51 = arith.constant 0 : index
    %135 = vector.load %arg2[%134, %c0_50, %c0_51] : memref<8x8x512xf32, #tpu.memory_space<vmem>>, vector<1x8x512xf32>
    %136 = vector.shape_cast %135 : vector<1x8x512xf32> to vector<8x512xf32>
    %137 = arith.truncf %129 : vector<8x128xf32> to vector<8x128xbf16>
    %cst_52 = arith.constant dense<0.000000e+00> : vector<8x512xf32>
    %138 = tpu.matmul %137, %3, %cst_52 {dimension_numbers = #tpu.dot_dimension_numbers<[1], [0], [0], [1], [0, 0, 1, 1], [], []>} : vector<8x128xbf16>, vector<128x512xbf16>, vector<8x512xf32> -> vector<8x512xf32>
    %139 = arith.addf %136, %138 : vector<8x512xf32>
    %140 = math.tanh %139 : vector<8x512xf32>
    %141 = vector.extract_strided_slice %140 {offsets = [0, 0], sizes = [8, 128], strides = [1, 1]} : vector<8x512xf32> to vector<8x128xf32>
    %cst_53 = arith.constant 5.000000e-01 : f32
    %142 = vector.broadcast %cst_53 : f32 to vector<8x128xf32>
    %143 = arith.mulf %142, %141 : vector<8x128xf32>
    %cst_54 = arith.constant 5.000000e-01 : f32
    %144 = vector.broadcast %cst_54 : f32 to vector<8x128xf32>
    %145 = arith.addf %144, %143 : vector<8x128xf32>
    %146 = vector.extract_strided_slice %140 {offsets = [0, 128], sizes = [8, 128], strides = [1, 1]} : vector<8x512xf32> to vector<8x128xf32>
    %cst_55 = arith.constant 5.000000e-01 : f32
    %147 = vector.broadcast %cst_55 : f32 to vector<8x128xf32>
    %148 = arith.mulf %147, %146 : vector<8x128xf32>
    %cst_56 = arith.constant 5.000000e-01 : f32
    %149 = vector.broadcast %cst_56 : f32 to vector<8x128xf32>
    %150 = arith.addf %149, %148 : vector<8x128xf32>
    %151 = vector.extract_strided_slice %140 {offsets = [0, 256], sizes = [8, 128], strides = [1, 1]} : vector<8x512xf32> to vector<8x128xf32>
    %152 = vector.extract_strided_slice %140 {offsets = [0, 384], sizes = [8, 128], strides = [1, 1]} : vector<8x512xf32> to vector<8x128xf32>
    %cst_57 = arith.constant 5.000000e-01 : f32
    %153 = vector.broadcast %cst_57 : f32 to vector<8x128xf32>
    %154 = arith.mulf %153, %152 : vector<8x128xf32>
    %cst_58 = arith.constant 5.000000e-01 : f32
    %155 = vector.broadcast %cst_58 : f32 to vector<8x128xf32>
    %156 = arith.addf %155, %154 : vector<8x128xf32>
    %157 = arith.mulf %150, %127 : vector<8x128xf32>
    %158 = arith.mulf %145, %151 : vector<8x128xf32>
    %159 = arith.addf %157, %158 : vector<8x128xf32>
    %160 = math.tanh %159 : vector<8x128xf32>
    %161 = arith.mulf %156, %160 : vector<8x128xf32>
    %162 = arith.index_cast %c4_i32 : i32 to index
    %c0_59 = arith.constant 0 : index
    %c0_60 = arith.constant 0 : index
    %163 = vector.load %arg6[%162, %c0_59, %c0_60] : memref<8x8x128xf32, #tpu.memory_space<vmem>>, vector<1x8x128xf32>
    %164 = vector.shape_cast %163 : vector<1x8x128xf32> to vector<8x128xf32>
    %165 = vector.shape_cast %161 : vector<8x128xf32> to vector<1x8x128xf32>
    tpu.vector_store %arg6[%162, %c0_59, %c0_60], %165 {strides = array<i32>} : memref<8x8x128xf32, #tpu.memory_space<vmem>>, vector<1x8x128xf32>,
    %c5_i32 = arith.constant 5 : i32
    %166 = arith.index_cast %c5_i32 : i32 to index
    %c0_61 = arith.constant 0 : index
    %c0_62 = arith.constant 0 : index
    %167 = vector.load %arg2[%166, %c0_61, %c0_62] : memref<8x8x512xf32, #tpu.memory_space<vmem>>, vector<1x8x512xf32>
    %168 = vector.shape_cast %167 : vector<1x8x512xf32> to vector<8x512xf32>
    %169 = arith.truncf %161 : vector<8x128xf32> to vector<8x128xbf16>
    %cst_63 = arith.constant dense<0.000000e+00> : vector<8x512xf32>
    %170 = tpu.matmul %169, %3, %cst_63 {dimension_numbers = #tpu.dot_dimension_numbers<[1], [0], [0], [1], [0, 0, 1, 1], [], []>} : vector<8x128xbf16>, vector<128x512xbf16>, vector<8x512xf32> -> vector<8x512xf32>
    %171 = arith.addf %168, %170 : vector<8x512xf32>
    %172 = math.tanh %171 : vector<8x512xf32>
    %173 = vector.extract_strided_slice %172 {offsets = [0, 0], sizes = [8, 128], strides = [1, 1]} : vector<8x512xf32> to vector<8x128xf32>
    %cst_64 = arith.constant 5.000000e-01 : f32
    %174 = vector.broadcast %cst_64 : f32 to vector<8x128xf32>
    %175 = arith.mulf %174, %173 : vector<8x128xf32>
    %cst_65 = arith.constant 5.000000e-01 : f32
    %176 = vector.broadcast %cst_65 : f32 to vector<8x128xf32>
    %177 = arith.addf %176, %175 : vector<8x128xf32>
    %178 = vector.extract_strided_slice %172 {offsets = [0, 128], sizes = [8, 128], strides = [1, 1]} : vector<8x512xf32> to vector<8x128xf32>
    %cst_66 = arith.constant 5.000000e-01 : f32
    %179 = vector.broadcast %cst_66 : f32 to vector<8x128xf32>
    %180 = arith.mulf %179, %178 : vector<8x128xf32>
    %cst_67 = arith.constant 5.000000e-01 : f32
    %181 = vector.broadcast %cst_67 : f32 to vector<8x128xf32>
    %182 = arith.addf %181, %180 : vector<8x128xf32>
    %183 = vector.extract_strided_slice %172 {offsets = [0, 256], sizes = [8, 128], strides = [1, 1]} : vector<8x512xf32> to vector<8x128xf32>
    %184 = vector.extract_strided_slice %172 {offsets = [0, 384], sizes = [8, 128], strides = [1, 1]} : vector<8x512xf32> to vector<8x128xf32>
    %cst_68 = arith.constant 5.000000e-01 : f32
    %185 = vector.broadcast %cst_68 : f32 to vector<8x128xf32>
    %186 = arith.mulf %185, %184 : vector<8x128xf32>
    %cst_69 = arith.constant 5.000000e-01 : f32
    %187 = vector.broadcast %cst_69 : f32 to vector<8x128xf32>
    %188 = arith.addf %187, %186 : vector<8x128xf32>
    %189 = arith.mulf %182, %159 : vector<8x128xf32>
    %190 = arith.mulf %177, %183 : vector<8x128xf32>
    %191 = arith.addf %189, %190 : vector<8x128xf32>
    %192 = math.tanh %191 : vector<8x128xf32>
    %193 = arith.mulf %188, %192 : vector<8x128xf32>
    %194 = arith.index_cast %c5_i32 : i32 to index
    %c0_70 = arith.constant 0 : index
    %c0_71 = arith.constant 0 : index
    %195 = vector.load %arg6[%194, %c0_70, %c0_71] : memref<8x8x128xf32, #tpu.memory_space<vmem>>, vector<1x8x128xf32>
    %196 = vector.shape_cast %195 : vector<1x8x128xf32> to vector<8x128xf32>
    %197 = vector.shape_cast %193 : vector<8x128xf32> to vector<1x8x128xf32>
    tpu.vector_store %arg6[%194, %c0_70, %c0_71], %197 {strides = array<i32>} : memref<8x8x128xf32, #tpu.memory_space<vmem>>, vector<1x8x128xf32>,
    %c6_i32 = arith.constant 6 : i32
    %198 = arith.index_cast %c6_i32 : i32 to index
    %c0_72 = arith.constant 0 : index
    %c0_73 = arith.constant 0 : index
    %199 = vector.load %arg2[%198, %c0_72, %c0_73] : memref<8x8x512xf32, #tpu.memory_space<vmem>>, vector<1x8x512xf32>
    %200 = vector.shape_cast %199 : vector<1x8x512xf32> to vector<8x512xf32>
    %201 = arith.truncf %193 : vector<8x128xf32> to vector<8x128xbf16>
    %cst_74 = arith.constant dense<0.000000e+00> : vector<8x512xf32>
    %202 = tpu.matmul %201, %3, %cst_74 {dimension_numbers = #tpu.dot_dimension_numbers<[1], [0], [0], [1], [0, 0, 1, 1], [], []>} : vector<8x128xbf16>, vector<128x512xbf16>, vector<8x512xf32> -> vector<8x512xf32>
    %203 = arith.addf %200, %202 : vector<8x512xf32>
    %204 = math.tanh %203 : vector<8x512xf32>
    %205 = vector.extract_strided_slice %204 {offsets = [0, 0], sizes = [8, 128], strides = [1, 1]} : vector<8x512xf32> to vector<8x128xf32>
    %cst_75 = arith.constant 5.000000e-01 : f32
    %206 = vector.broadcast %cst_75 : f32 to vector<8x128xf32>
    %207 = arith.mulf %206, %205 : vector<8x128xf32>
    %cst_76 = arith.constant 5.000000e-01 : f32
    %208 = vector.broadcast %cst_76 : f32 to vector<8x128xf32>
    %209 = arith.addf %208, %207 : vector<8x128xf32>
    %210 = vector.extract_strided_slice %204 {offsets = [0, 128], sizes = [8, 128], strides = [1, 1]} : vector<8x512xf32> to vector<8x128xf32>
    %cst_77 = arith.constant 5.000000e-01 : f32
    %211 = vector.broadcast %cst_77 : f32 to vector<8x128xf32>
    %212 = arith.mulf %211, %210 : vector<8x128xf32>
    %cst_78 = arith.constant 5.000000e-01 : f32
    %213 = vector.broadcast %cst_78 : f32 to vector<8x128xf32>
    %214 = arith.addf %213, %212 : vector<8x128xf32>
    %215 = vector.extract_strided_slice %204 {offsets = [0, 256], sizes = [8, 128], strides = [1, 1]} : vector<8x512xf32> to vector<8x128xf32>
    %216 = vector.extract_strided_slice %204 {offsets = [0, 384], sizes = [8, 128], strides = [1, 1]} : vector<8x512xf32> to vector<8x128xf32>
    %cst_79 = arith.constant 5.000000e-01 : f32
    %217 = vector.broadcast %cst_79 : f32 to vector<8x128xf32>
    %218 = arith.mulf %217, %216 : vector<8x128xf32>
    %cst_80 = arith.constant 5.000000e-01 : f32
    %219 = vector.broadcast %cst_80 : f32 to vector<8x128xf32>
    %220 = arith.addf %219, %218 : vector<8x128xf32>
    %221 = arith.mulf %214, %191 : vector<8x128xf32>
    %222 = arith.mulf %209, %215 : vector<8x128xf32>
    %223 = arith.addf %221, %222 : vector<8x128xf32>
    %224 = math.tanh %223 : vector<8x128xf32>
    %225 = arith.mulf %220, %224 : vector<8x128xf32>
    %226 = arith.index_cast %c6_i32 : i32 to index
    %c0_81 = arith.constant 0 : index
    %c0_82 = arith.constant 0 : index
    %227 = vector.load %arg6[%226, %c0_81, %c0_82] : memref<8x8x128xf32, #tpu.memory_space<vmem>>, vector<1x8x128xf32>
    %228 = vector.shape_cast %227 : vector<1x8x128xf32> to vector<8x128xf32>
    %229 = vector.shape_cast %225 : vector<8x128xf32> to vector<1x8x128xf32>
    tpu.vector_store %arg6[%226, %c0_81, %c0_82], %229 {strides = array<i32>} : memref<8x8x128xf32, #tpu.memory_space<vmem>>, vector<1x8x128xf32>,
    %c7_i32 = arith.constant 7 : i32
    %230 = arith.index_cast %c7_i32 : i32 to index
    %c0_83 = arith.constant 0 : index
    %c0_84 = arith.constant 0 : index
    %231 = vector.load %arg2[%230, %c0_83, %c0_84] : memref<8x8x512xf32, #tpu.memory_space<vmem>>, vector<1x8x512xf32>
    %232 = vector.shape_cast %231 : vector<1x8x512xf32> to vector<8x512xf32>
    %233 = arith.truncf %225 : vector<8x128xf32> to vector<8x128xbf16>
    %cst_85 = arith.constant dense<0.000000e+00> : vector<8x512xf32>
    %234 = tpu.matmul %233, %3, %cst_85 {dimension_numbers = #tpu.dot_dimension_numbers<[1], [0], [0], [1], [0, 0, 1, 1], [], []>} : vector<8x128xbf16>, vector<128x512xbf16>, vector<8x512xf32> -> vector<8x512xf32>
    %235 = arith.addf %232, %234 : vector<8x512xf32>
    %236 = math.tanh %235 : vector<8x512xf32>
    %237 = vector.extract_strided_slice %236 {offsets = [0, 0], sizes = [8, 128], strides = [1, 1]} : vector<8x512xf32> to vector<8x128xf32>
    %cst_86 = arith.constant 5.000000e-01 : f32
    %238 = vector.broadcast %cst_86 : f32 to vector<8x128xf32>
    %239 = arith.mulf %238, %237 : vector<8x128xf32>
    %cst_87 = arith.constant 5.000000e-01 : f32
    %240 = vector.broadcast %cst_87 : f32 to vector<8x128xf32>
    %241 = arith.addf %240, %239 : vector<8x128xf32>
    %242 = vector.extract_strided_slice %236 {offsets = [0, 128], sizes = [8, 128], strides = [1, 1]} : vector<8x512xf32> to vector<8x128xf32>
    %cst_88 = arith.constant 5.000000e-01 : f32
    %243 = vector.broadcast %cst_88 : f32 to vector<8x128xf32>
    %244 = arith.mulf %243, %242 : vector<8x128xf32>
    %cst_89 = arith.constant 5.000000e-01 : f32
    %245 = vector.broadcast %cst_89 : f32 to vector<8x128xf32>
    %246 = arith.addf %245, %244 : vector<8x128xf32>
    %247 = vector.extract_strided_slice %236 {offsets = [0, 256], sizes = [8, 128], strides = [1, 1]} : vector<8x512xf32> to vector<8x128xf32>
    %248 = vector.extract_strided_slice %236 {offsets = [0, 384], sizes = [8, 128], strides = [1, 1]} : vector<8x512xf32> to vector<8x128xf32>
    %cst_90 = arith.constant 5.000000e-01 : f32
    %249 = vector.broadcast %cst_90 : f32 to vector<8x128xf32>
    %250 = arith.mulf %249, %248 : vector<8x128xf32>
    %cst_91 = arith.constant 5.000000e-01 : f32
    %251 = vector.broadcast %cst_91 : f32 to vector<8x128xf32>
    %252 = arith.addf %251, %250 : vector<8x128xf32>
    %253 = arith.mulf %246, %223 : vector<8x128xf32>
    %254 = arith.mulf %241, %247 : vector<8x128xf32>
    %255 = arith.addf %253, %254 : vector<8x128xf32>
    %256 = math.tanh %255 : vector<8x128xf32>
    %257 = arith.mulf %252, %256 : vector<8x128xf32>
    %258 = arith.index_cast %c7_i32 : i32 to index
    %c0_92 = arith.constant 0 : index
    %c0_93 = arith.constant 0 : index
    %259 = vector.load %arg6[%258, %c0_92, %c0_93] : memref<8x8x128xf32, #tpu.memory_space<vmem>>, vector<1x8x128xf32>
    %260 = vector.shape_cast %259 : vector<1x8x128xf32> to vector<8x128xf32>
    %261 = vector.shape_cast %257 : vector<8x128xf32> to vector<1x8x128xf32>
    tpu.vector_store %arg6[%258, %c0_92, %c0_93], %261 {strides = array<i32>} : memref<8x8x128xf32, #tpu.memory_space<vmem>>, vector<1x8x128xf32>,
    %c8_i32 = arith.constant 8 : i32
    %c0_94 = arith.constant 0 : index
    %c0_95 = arith.constant 0 : index
    %262 = vector.load %arg7[%c0_94, %c0_95] : memref<8x128xf32, #tpu.memory_space<vmem>>, vector<8x128xf32>
    tpu.vector_store %arg7[%c0_94, %c0_95], %257 {strides = array<i32>} : memref<8x128xf32, #tpu.memory_space<vmem>>, vector<8x128xf32>,
    %c0_96 = arith.constant 0 : index
    %c0_97 = arith.constant 0 : index
    %263 = vector.load %arg8[%c0_96, %c0_97] : memref<8x128xf32, #tpu.memory_space<vmem>>, vector<8x128xf32>
    tpu.vector_store %arg8[%c0_96, %c0_97], %255 {strides = array<i32>} : memref<8x128xf32, #tpu.memory_space<vmem>>, vector<8x128xf32>,
    return
  }
  func.func @transform_0(%arg0: i32, %arg1: i32) -> (i32, i32, i32) {
    %c0_i32 = arith.constant 0 : i32
    %c0_i32_0 = arith.constant 0 : i32
    return %arg1, %arg0, %c0_i32 : i32, i32, i32
  }
  func.func @transform_1(%arg0: i32, %arg1: i32) -> (i32, i32) {
    %c0_i32 = arith.constant 0 : i32
    %c0_i32_0 = arith.constant 0 : i32
    %c0_i32_1 = arith.constant 0 : i32
    return %c0_i32, %c0_i32_0 : i32, i32
  }
  func.func @transform_2(%arg0: i32, %arg1: i32) -> (i32, i32) {
    %c0_i32 = arith.constant 0 : i32
    %c0_i32_0 = arith.constant 0 : i32
    return %arg0, %c0_i32 : i32, i32
  }
  func.func @transform_3(%arg0: i32, %arg1: i32) -> (i32, i32) {
    %c0_i32 = arith.constant 0 : i32
    %c0_i32_0 = arith.constant 0 : i32
    return %arg0, %c0_i32 : i32, i32
  }
  func.func @transform_4(%arg0: i32, %arg1: i32) -> (i32, i32, i32) {
    %c0_i32 = arith.constant 0 : i32
    %c0_i32_0 = arith.constant 0 : i32
    return %arg1, %arg0, %c0_i32 : i32, i32, i32
  }
  func.func @transform_5(%arg0: i32, %arg1: i32) -> (i32, i32) {
    %c0_i32 = arith.constant 0 : i32
    %c0_i32_0 = arith.constant 0 : i32
    return %arg0, %c0_i32 : i32, i32
  }
  func.func @transform_6(%arg0: i32, %arg1: i32) -> (i32, i32) {
    %c0_i32 = arith.constant 0 : i32
    %c0_i32_0 = arith.constant 0 : i32
    return %arg0, %c0_i32 : i32, i32
  }
}

</mosaic_0001>

<llo_original>
// kernel: tpu_custom_call.1
$region0: #{tpu_custom_call.1}
  #allocation0 [shape = 'u32[]', space=smem, size = 0x4, offset = 0x4, fixed_abs, tag = 'smem constant byte address 0x4 - core index']
  #allocation1 [shape = 'u32[144,128]{1,0:T(1,128)}', space=vmem, size = 0x12000, scoped, tag = 'internal scratch']
  %s0 = inlined_call_operand.hbm [shape: f32[8,8,512], index: 0, kind: input, shape index: {}]
  %s1 = inlined_call_operand.hbm [shape: bf16[128,512], index: 1, kind: input, shape index: {}]
  %s2 = inlined_call_operand.hbm [shape: f32[8,128], index: 2, kind: input, shape index: {}]
  %s3 = inlined_call_operand.vmem [shape: f32[8,128], index: 3, kind: input, shape index: {}]
  %s4 = inlined_call_operand.hbm [shape: f32[8,8,128], index: 4, kind: output, shape index: {0}]
  %s5 = inlined_call_operand.hbm [shape: f32[8,128], index: 5, kind: output, shape index: {1}]
  %s6 = inlined_call_operand.hbm [shape: f32[8,128], index: 6, kind: output, shape index: {2}]
  %7 = xla_tuple %s4, %s5, %s6
  %s8 = sld [smem:[#allocation0]]
  $region58: #{tpu_custom_call.1} parent=0
    _
  %s10 = ssub.s32 1, %s8
  %s11 = scalar_select 0, %s10, %s8
  $region1: #{tpu_custom_call.1} parent=0
    #allocation2 [shape = 'u8[131072]{0}', space=vmem, size = 0x20000, scoped, tag = 'input window, operand 0, single buffered']
    #allocation3 [shape = 's32[1]{0}', space=sflag, size = 0x4, scoped, tag = 'scoped memory for tpu_custom_call.1']
    #allocation4 [shape = 's32[1]{0}', space=sflag, size = 0x4, scoped, tag = 'scoped memory for tpu_custom_call.1']
    #allocation5 [shape = 'u8[131072]{0}', space=vmem, size = 0x20000, scoped, tag = 'input window, operand 1, single buffered']
    #allocation6 [shape = 's32[1]{0}', space=sflag, size = 0x4, scoped, tag = 'scoped memory for tpu_custom_call.1']
    #allocation7 [shape = 'u8[4096]{0}', space=vmem, size = 0x1000, scoped, tag = 'input window, operand 2, single buffered']
    #allocation8 [shape = 'u8[32768]{0}', space=vmem, size = 0x8000, scoped, tag = 'output window, operand 0, single buffered']
    #allocation9 [shape = 'u8[4096]{0}', space=vmem, size = 0x1000, scoped, tag = 'output window, operand 1, single buffered']
    #allocation10 [shape = 's32[1]{0}', space=sflag, size = 0x4, scoped, tag = 'scoped memory for tpu_custom_call.1']
    #allocation11 [shape = 'u8[4096]{0}', space=vmem, size = 0x1000, scoped, tag = 'output window, operand 2, single buffered']
    %12 = vsyncpa [#allocation3], 0
    %13 = vsyncpa [#allocation6], 0
    %14 = vsyncpa [#allocation4], 0
    %15 = vsyncpa [#allocation10], 0
    // Predicated region
    $region2: #{tpu_custom_call.1} parent=1 // pred_check
      _
    $region3: #{tpu_custom_call.1} parent=1 // pred_check_branch
      %17 = sbr.rel (0) target = $region5
    $region4: #{tpu_custom_call.1} parent=1 // pred_region
      %s19 = ssub.s32 4096, 4096
      %20 = vsyncadd [#allocation3], %s19
      %s21 = sshll.u32 [#allocation2], 4
      %s22 = int_to_ptr.vmem [resolvable:$true] %s21
      %27 = dma.hbm_to_vmem [thread:$0]  %s0, 4096, %s22, [#allocation3], 512, 512, 32
    $region5: #{tpu_custom_call.1} parent=1 // pred_fallthru
      _
    // Predicated region
    $region6: #{tpu_custom_call.1} parent=1 // pred_check
      _
    $region7: #{tpu_custom_call.1} parent=1 // pred_check_branch
      %29 = sbr.rel (0) target = $region9
    $region8: #{tpu_custom_call.1} parent=1 // pred_region
      %s31 = ssub.s32 4096, 4096
      %32 = vsyncadd [#allocation6], %s31
      %s33 = sshll.u32 [#allocation5], 4
      %s34 = int_to_ptr.vmem [resolvable:$true] %s33
      %39 = dma.hbm_to_vmem [thread:$0]  %s1, 4096, %s34, [#allocation6], 256, 256, 16
    $region9: #{tpu_custom_call.1} parent=1 // pred_fallthru
      _
    // Predicated region
    $region10: #{tpu_custom_call.1} parent=1 // pred_check
      _
    $region11: #{tpu_custom_call.1} parent=1 // pred_check_branch
      %41 = sbr.rel (0) target = $region13
    $region12: #{tpu_custom_call.1} parent=1 // pred_region
      %s43 = ssub.s32 128, 128
      %44 = vsyncadd [#allocation6], %s43
      %s46 = sshll.u32 [#allocation7], 4
      %s47 = int_to_ptr.vmem [resolvable:$true] %s46
      %49 = dma.hbm_to_vmem [thread:$0]  %s2, 128, %s47, [#allocation6]
    $region13: #{tpu_custom_call.1} parent=1 // pred_fallthru
      _
    // Predicated region
    $region14: #{tpu_custom_call.1} parent=1 // pred_check
      _
    $region15: #{tpu_custom_call.1} parent=1 // pred_check_branch
      %51 = sbr.rel (0) target = $region17
    $region16: #{tpu_custom_call.1} parent=1 // pred_region
      _
    $region17: #{tpu_custom_call.1} parent=1 // pred_fallthru
      _
    // Predicated region
    $region18: #{tpu_custom_call.1} parent=1 // pred_check
      _
    $region19: #{tpu_custom_call.1} parent=1 // pred_check_branch
      %53 = sbr.rel (0) target = $region21
    $region20: #{tpu_custom_call.1} parent=1 // pred_region
      %54 = dma.done [#allocation3], 4096
    $region21: #{tpu_custom_call.1} parent=1 // pred_fallthru
      _
    // Predicated region
    $region22: #{tpu_custom_call.1} parent=1 // pred_check
      _
    $region23: #{tpu_custom_call.1} parent=1 // pred_check_branch
      %56 = sbr.rel (0) target = $region25
    $region24: #{tpu_custom_call.1} parent=1 // pred_region
      %57 = dma.done [#allocation6], 4096
    $region25: #{tpu_custom_call.1} parent=1 // pred_fallthru
      _
    // Predicated region
    $region26: #{tpu_custom_call.1} parent=1 // pred_check
      _
    $region27: #{tpu_custom_call.1} parent=1 // pred_check_branch
      %59 = sbr.rel (0) target = $region29
    $region28: #{tpu_custom_call.1} parent=1 // pred_region
      %60 = dma.done [#allocation6], 128
    $region29: #{tpu_custom_call.1} parent=1 // pred_fallthru
      _
    %p62 = scmp.eq.s32.totalorder 0, 0
    // Predicated region
    $region30: #{tpu_custom_call.1} parent=1 // pred_check
      %p63 = pneg %p62
    $region31: #{tpu_custom_call.1} parent=1 // pred_check_branch
      %65 = sbr.rel (%p63) target = $region33
    $region32: #{tpu_custom_call.1} parent=1 // pred_region
      %v66 = vld [vmem:[#allocation7] sm:$0xff]
      %67 = vst [vmem:[#allocation9] sm:$0xff] %v66
      %v68 = vld [vmem:[%s3] sm:$0xff]
      %69 = vst [vmem:[#allocation11] sm:$0xff] %v68
    $region33: #{tpu_custom_call.1} parent=1 // pred_fallthru
      _
    %v70 = vld [vmem:[#allocation5] sm:$0xff]
    %v71 = vld [vmem:[#allocation5 + $0x8] sm:$0xff]
    %v72 = vld [vmem:[#allocation5 + $0x10] sm:$0xff]
    %v73 = vld [vmem:[#allocation5 + $0x18] sm:$0xff]
    %v74 = vld [vmem:[#allocation5 + $0x20] sm:$0xff]
    %v75 = vld [vmem:[#allocation5 + $0x28] sm:$0xff]
    %v76 = vld [vmem:[#allocation5 + $0x30] sm:$0xff]
    %v77 = vld [vmem:[#allocation5 + $0x38] sm:$0xff]
    %v78 = vld [vmem:[#allocation5 + $0x40] sm:$0xff]
    %v79 = vld [vmem:[#allocation5 + $0x48] sm:$0xff]
    %v80 = vld [vmem:[#allocation5 + $0x50] sm:$0xff]
    %v81 = vld [vmem:[#allocation5 + $0x58] sm:$0xff]
    %v82 = vld [vmem:[#allocation5 + $0x60] sm:$0xff]
    %v83 = vld [vmem:[#allocation5 + $0x68] sm:$0xff]
    %v84 = vld [vmem:[#allocation5 + $0x70] sm:$0xff]
    %v85 = vld [vmem:[#allocation5 + $0x78] sm:$0xff]
    %v86 = vld [vmem:[#allocation5 + $0x80] sm:$0xff]
    %v87 = vld [vmem:[#allocation5 + $0x88] sm:$0xff]
    %v88 = vld [vmem:[#allocation5 + $0x90] sm:$0xff]
    %v89 = vld [vmem:[#allocation5 + $0x98] sm:$0xff]
    %v90 = vld [vmem:[#allocation5 + $0xa0] sm:$0xff]
    %v91 = vld [vmem:[#allocation5 + $0xa8] sm:$0xff]
    %v92 = vld [vmem:[#allocation5 + $0xb0] sm:$0xff]
    %v93 = vld [vmem:[#allocation5 + $0xb8] sm:$0xff]
    %v94 = vld [vmem:[#allocation5 + $0xc0] sm:$0xff]
    %v95 = vld [vmem:[#allocation5 + $0xc8] sm:$0xff]
    %v96 = vld [vmem:[#allocation5 + $0xd0] sm:$0xff]
    %v97 = vld [vmem:[#allocation5 + $0xd8] sm:$0xff]
    %v98 = vld [vmem:[#allocation5 + $0xe0] sm:$0xff]
    %v99 = vld [vmem:[#allocation5 + $0xe8] sm:$0xff]
    %v100 = vld [vmem:[#allocation5 + $0xf0] sm:$0xff]
    %v101 = vld [vmem:[#allocation5 + $0xf8] sm:$0xff]
    %v102 = vld [vmem:[#allocation9] sm:$0xff]
    %v103 = vld [vmem:[#allocation11] sm:$0xff]
    %v104 = vld [vmem:[#allocation2] sm:$0xff]
    %v105 = vld [vmem:[#allocation2 + $0x8] sm:$0xff]
    %v106 = vld [vmem:[#allocation2 + $0x10] sm:$0xff]
    %v107 = vld [vmem:[#allocation2 + $0x18] sm:$0xff]
    %v108 = vpack.c.bf16 %v102, %v102
    %v141 = vunpack.c.l.b16 %v70
    %v142 = vunpack.c.h.b16 %v70
    %v143 = vunpack.c.l.b16 %v71
    %v144 = vunpack.c.h.b16 %v71
    %v145 = vunpack.c.l.b16 %v72
    %v146 = vunpack.c.h.b16 %v72
    %v147 = vunpack.c.l.b16 %v73
    %v148 = vunpack.c.h.b16 %v73
    %v149 = vunpack.c.l.b16 %v74
    %v150 = vunpack.c.h.b16 %v74
    %v151 = vunpack.c.l.b16 %v75
    %v152 = vunpack.c.h.b16 %v75
    %v153 = vunpack.c.l.b16 %v76
    %v154 = vunpack.c.h.b16 %v76
    %v155 = vunpack.c.l.b16 %v77
    %v156 = vunpack.c.h.b16 %v77
    %v157 = vunpack.c.l.b16 %v78
    %v158 = vunpack.c.h.b16 %v78
    %v159 = vunpack.c.l.b16 %v79
    %v160 = vunpack.c.h.b16 %v79
    %v161 = vunpack.c.l.b16 %v80
    %v162 = vunpack.c.h.b16 %v80
    %v163 = vunpack.c.l.b16 %v81
    %v164 = vunpack.c.h.b16 %v81
    %v165 = vunpack.c.l.b16 %v82
    %v166 = vunpack.c.h.b16 %v82
    %v167 = vunpack.c.l.b16 %v83
    %v168 = vunpack.c.h.b16 %v83
    %v169 = vunpack.c.l.b16 %v84
    %v170 = vunpack.c.h.b16 %v84
    %v171 = vunpack.c.l.b16 %v85
    %v172 = vunpack.c.h.b16 %v85
    %v173 = vunpack.c.l.b16 %v86
    %v174 = vunpack.c.h.b16 %v86
    %v175 = vunpack.c.l.b16 %v87
    %v176 = vunpack.c.h.b16 %v87
    %v177 = vunpack.c.l.b16 %v88
    %v178 = vunpack.c.h.b16 %v88
    %v179 = vunpack.c.l.b16 %v89
    %v180 = vunpack.c.h.b16 %v89
    %v181 = vunpack.c.l.b16 %v90
    %v182 = vunpack.c.h.b16 %v90
    %v183 = vunpack.c.l.b16 %v91
    %v184 = vunpack.c.h.b16 %v91
    %v185 = vunpack.c.l.b16 %v92
    %v186 = vunpack.c.h.b16 %v92
    %v187 = vunpack.c.l.b16 %v93
    %v188 = vunpack.c.h.b16 %v93
    %v189 = vunpack.c.l.b16 %v94
    %v190 = vunpack.c.h.b16 %v94
    %v191 = vunpack.c.l.b16 %v95
    %v192 = vunpack.c.h.b16 %v95
    %v193 = vunpack.c.l.b16 %v96
    %v194 = vunpack.c.h.b16 %v96
    %v195 = vunpack.c.l.b16 %v97
    %v196 = vunpack.c.h.b16 %v97
    %v197 = vunpack.c.l.b16 %v98
    %v198 = vunpack.c.h.b16 %v98
    %v199 = vunpack.c.l.b16 %v99
    %v200 = vunpack.c.h.b16 %v99
    %v201 = vunpack.c.l.b16 %v100
    %v202 = vunpack.c.h.b16 %v100
    %v203 = vunpack.c.l.b16 %v101
    %v204 = vunpack.c.h.b16 %v101
    %v205 = vpack.c.b16 %v145, %v141
    %v206 = vpack.c.b16 %v146, %v142
    %v207 = vpack.c.b16 %v147, %v143
    %v208 = vpack.c.b16 %v148, %v144
    %v209 = vpack.c.b16 %v153, %v149
    %v210 = vpack.c.b16 %v154, %v150
    %v211 = vpack.c.b16 %v155, %v151
    %v212 = vpack.c.b16 %v156, %v152
    %v213 = vpack.c.b16 %v161, %v157
    %v214 = vpack.c.b16 %v162, %v158
    %v215 = vpack.c.b16 %v163, %v159
    %v216 = vpack.c.b16 %v164, %v160
    %v217 = vpack.c.b16 %v169, %v165
    %v218 = vpack.c.b16 %v170, %v166
    %v219 = vpack.c.b16 %v171, %v167
    %v220 = vpack.c.b16 %v172, %v168
    %v221 = vpack.c.b16 %v177, %v173
    %v222 = vpack.c.b16 %v178, %v174
    %v223 = vpack.c.b16 %v179, %v175
    %v224 = vpack.c.b16 %v180, %v176
    %v225 = vpack.c.b16 %v185, %v181
    %v226 = vpack.c.b16 %v186, %v182
    %v227 = vpack.c.b16 %v187, %v183
    %v228 = vpack.c.b16 %v188, %v184
    %v229 = vpack.c.b16 %v193, %v189
    %v230 = vpack.c.b16 %v194, %v190
    %v231 = vpack.c.b16 %v195, %v191
    %v232 = vpack.c.b16 %v196, %v192
    %v233 = vpack.c.b16 %v201, %v197
    %v234 = vpack.c.b16 %v202, %v198
    %v235 = vpack.c.b16 %v203, %v199
    %v236 = vpack.c.b16 %v204, %v200
    %269 = vmatprep.subr.bf16.mxu0 %v206
    %270 = vmatpush1.bf16.msra.mxu0 %v205
    %271 = vmatprep.subr.bf16.mxu0 %v210
    %272 = vmatpush1.bf16.msra.mxu0 %v209
    %273 = vmatprep.subr.bf16.mxu0 %v214
    %274 = vmatpush1.bf16.msra.mxu0 %v213
    %275 = vmatprep.subr.bf16.mxu0 %v218
    %276 = vmatpush1.bf16.msra.mxu0 %v217
    %277 = vmatprep.subr.bf16.mxu0 %v222
    %278 = vmatpush1.bf16.msra.mxu0 %v221
    %279 = vmatprep.subr.bf16.mxu0 %v226
    %280 = vmatpush1.bf16.msra.mxu0 %v225
    %281 = vmatprep.subr.bf16.mxu0 %v230
    %282 = vmatpush1.bf16.msra.mxu0 %v229
    %283 = vmatprep.subr.bf16.mxu0 %v234
    %284 = vmatpush1.bf16.msra.mxu0 %v233
    %285 = vmatprep.subr.bf16.mxu0 0
    %286 = vmatpush1.bf16.msra.mxu0 0
    %287 = vmatprep.subr.bf16.mxu0 0
    %288 = vmatpush1.bf16.msra.mxu0 0
    %289 = vmatprep.subr.bf16.mxu0 0
    %290 = vmatpush1.bf16.msra.mxu0 0
    %291 = vmatprep.subr.bf16.mxu0 0
    %292 = vmatpush1.bf16.msra.mxu0 0
    %293 = vmatprep.subr.bf16.mxu0 0
    %294 = vmatpush1.bf16.msra.mxu0 0
    %295 = vmatprep.subr.bf16.mxu0 0
    %296 = vmatpush1.bf16.msra.mxu0 0
    %297 = vmatprep.subr.bf16.mxu0 0
    %298 = vmatpush1.bf16.msra.mxu0 0
    %299 = vmatprep.subr.bf16.mxu0 0
    %300 = vmatpush1.bf16.msra.mxu0 0
    %301 = vmatprep.mubr.bf16.mxu0 0
    %302 = vmatmul.mubr.bf16.gmra.mrb[0].mxu0 %v108
    %v303 = vpop.f32.mrb[0].mxu0
    %v304 = vadd.f32 0.0, %v303
    %v305 = vpop.f32.mrb[0].mxu0
    %v306 = vadd.f32 0.0, %v305
    %v307 = vpop.f32.mrb[0].mxu0
    %v308 = vpop.f32.mrb[0].mxu0
    %309 = vdwg.mxu0
    %310 = vmatprep.subr.bf16.mxu0 %v208
    %311 = vmatpush1.bf16.msra.mxu0 %v207
    %312 = vmatprep.subr.bf16.mxu0 %v212
    %313 = vmatpush1.bf16.msra.mxu0 %v211
    %314 = vmatprep.subr.bf16.mxu0 %v216
    %315 = vmatpush1.bf16.msra.mxu0 %v215
    %316 = vmatprep.subr.bf16.mxu0 %v220
    %317 = vmatpush1.bf16.msra.mxu0 %v219
    %318 = vmatprep.subr.bf16.mxu0 %v224
    %319 = vmatpush1.bf16.msra.mxu0 %v223
    %320 = vmatprep.subr.bf16.mxu0 %v228
    %321 = vmatpush1.bf16.msra.mxu0 %v227
    %322 = vmatprep.subr.bf16.mxu0 %v232
    %323 = vmatpush1.bf16.msra.mxu0 %v231
    %324 = vmatprep.subr.bf16.mxu0 %v236
    %325 = vmatpush1.bf16.msra.mxu0 %v235
    %326 = vmatprep.subr.bf16.mxu0 0
    %327 = vmatpush1.bf16.msra.mxu0 0
    %328 = vmatprep.subr.bf16.mxu0 0
    %329 = vmatpush1.bf16.msra.mxu0 0
    %330 = vmatprep.subr.bf16.mxu0 0
    %331 = vmatpush1.bf16.msra.mxu0 0
    %332 = vmatprep.subr.bf16.mxu0 0
    %333 = vmatpush1.bf16.msra.mxu0 0
    %334 = vmatprep.subr.bf16.mxu0 0
    %335 = vmatpush1.bf16.msra.mxu0 0
    %336 = vmatprep.subr.bf16.mxu0 0
    %337 = vmatpush1.bf16.msra.mxu0 0
    %338 = vmatprep.subr.bf16.mxu0 0
    %339 = vmatpush1.bf16.msra.mxu0 0
    %340 = vmatprep.subr.bf16.mxu0 0
    %341 = vmatpush1.bf16.msra.mxu0 0
    %342 = vmatprep.mubr.bf16.mxu0 0
    %343 = vmatmul.mubr.bf16.gmra.mrb[0].mxu0 %v108
    %v344 = vpop.f32.mrb[0].mxu0
    %v345 = vadd.f32 0.0, %v344
    %v346 = vpop.f32.mrb[0].mxu0
    %v347 = vadd.f32 0.0, %v346
    %v348 = vpop.f32.mrb[0].mxu0
    %v349 = vpop.f32.mrb[0].mxu0
    %350 = vdwg.mxu0
    %v351 = vadd.f32 %v104, %v304
    %v352 = vadd.f32 %v105, %v306
    %v353 = vadd.f32 %v106, %v345
    %v354 = vadd.f32 %v107, %v347
    %v355 = vtanh.pop %v351
    %v356 = vtanh.pop %v352
    %v357 = vtanh.pop %v353
    %v358 = vtanh.pop %v354
    %v359 = vmul.f32 %v355, 0.5
    %v360 = vadd.f32 %v359, 0.5
    %v361 = vmul.f32 %v356, 0.5
    %v362 = vadd.f32 %v361, 0.5
    %v363 = vmul.f32 %v358, 0.5
    %v364 = vadd.f32 %v363, 0.5
    %v365 = vmul.f32 %v362, %v103
    %v366 = vmul.f32 %v360, %v357
    %v367 = vadd.f32 %v365, %v366
    %v368 = vtanh.pop %v367
    %v369 = vmul.f32 %v364, %v368
    %370 = vst [vmem:[#allocation8] sm:$0xff] %v369
    %s371 = scalar_lea.vmem [#allocation2], 32
    %v372 = vld [vmem:[%s371] sm:$0xff]
    %v373 = vld [vmem:[%s371 + $0x8] sm:$0xff]
    %v374 = vld [vmem:[%s371 + $0x10] sm:$0xff]
    %v375 = vld [vmem:[%s371 + $0x18] sm:$0xff]
    %v376 = vpack.c.bf16 %v369, %v369
    %377 = vmatprep.subr.bf16.mxu0 %v206
    %378 = vmatpush1.bf16.msra.mxu0 %v205
    %379 = vmatprep.subr.bf16.mxu0 %v210
    %380 = vmatpush1.bf16.msra.mxu0 %v209
    %381 = vmatprep.subr.bf16.mxu0 %v214
    %382 = vmatpush1.bf16.msra.mxu0 %v213
    %383 = vmatprep.subr.bf16.mxu0 %v218
    %384 = vmatpush1.bf16.msra.mxu0 %v217
    %385 = vmatprep.subr.bf16.mxu0 %v222
    %386 = vmatpush1.bf16.msra.mxu0 %v221
    %387 = vmatprep.subr.bf16.mxu0 %v226
    %388 = vmatpush1.bf16.msra.mxu0 %v225
    %389 = vmatprep.subr.bf16.mxu0 %v230
    %390 = vmatpush1.bf16.msra.mxu0 %v229
    %391 = vmatprep.subr.bf16.mxu0 %v234
    %392 = vmatpush1.bf16.msra.mxu0 %v233
    %393 = vmatprep.subr.bf16.mxu0 0
    %394 = vmatpush1.bf16.msra.mxu0 0
    %395 = vmatprep.subr.bf16.mxu0 0
    %396 = vmatpush1.bf16.msra.mxu0 0
    %397 = vmatprep.subr.bf16.mxu0 0
    %398 = vmatpush1.bf16.msra.mxu0 0
    %399 = vmatprep.subr.bf16.mxu0 0
    %400 = vmatpush1.bf16.msra.mxu0 0
    %401 = vmatprep.subr.bf16.mxu0 0
    %402 = vmatpush1.bf16.msra.mxu0 0
    %403 = vmatprep.subr.bf16.mxu0 0
    %404 = vmatpush1.bf16.msra.mxu0 0
    %405 = vmatprep.subr.bf16.mxu0 0
    %406 = vmatpush1.bf16.msra.mxu0 0
    %407 = vmatprep.subr.bf16.mxu0 0
    %408 = vmatpush1.bf16.msra.mxu0 0
    %409 = vmatprep.mubr.bf16.mxu0 0
    %410 = vmatmul.mubr.bf16.gmra.mrb[0].mxu0 %v376
    %v411 = vpop.f32.mrb[0].mxu0
    %v412 = vadd.f32 0.0, %v411
    %v413 = vpop.f32.mrb[0].mxu0
    %v414 = vadd.f32 0.0, %v413
    %v415 = vpop.f32.mrb[0].mxu0
    %v416 = vpop.f32.mrb[0].mxu0
    %417 = vdwg.mxu0
    %418 = vmatprep.subr.bf16.mxu0 %v208
    %419 = vmatpush1.bf16.msra.mxu0 %v207
    %420 = vmatprep.subr.bf16.mxu0 %v212
    %421 = vmatpush1.bf16.msra.mxu0 %v211
    %422 = vmatprep.subr.bf16.mxu0 %v216
    %423 = vmatpush1.bf16.msra.mxu0 %v215
    %424 = vmatprep.subr.bf16.mxu0 %v220
    %425 = vmatpush1.bf16.msra.mxu0 %v219
    %426 = vmatprep.subr.bf16.mxu0 %v224
    %427 = vmatpush1.bf16.msra.mxu0 %v223
    %428 = vmatprep.subr.bf16.mxu0 %v228
    %429 = vmatpush1.bf16.msra.mxu0 %v227
    %430 = vmatprep.subr.bf16.mxu0 %v232
    %431 = vmatpush1.bf16.msra.mxu0 %v231
    %432 = vmatprep.subr.bf16.mxu0 %v236
    %433 = vmatpush1.bf16.msra.mxu0 %v235
    %434 = vmatprep.subr.bf16.mxu0 0
    %435 = vmatpush1.bf16.msra.mxu0 0
    %436 = vmatprep.subr.bf16.mxu0 0
    %437 = vmatpush1.bf16.msra.mxu0 0
    %438 = vmatprep.subr.bf16.mxu0 0
    %439 = vmatpush1.bf16.msra.mxu0 0
    %440 = vmatprep.subr.bf16.mxu0 0
    %441 = vmatpush1.bf16.msra.mxu0 0
    %442 = vmatprep.subr.bf16.mxu0 0
    %443 = vmatpush1.bf16.msra.mxu0 0
    %444 = vmatprep.subr.bf16.mxu0 0
    %445 = vmatpush1.bf16.msra.mxu0 0
    %446 = vmatprep.subr.bf16.mxu0 0
    %447 = vmatpush1.bf16.msra.mxu0 0
    %448 = vmatprep.subr.bf16.mxu0 0
    %449 = vmatpush1.bf16.msra.mxu0 0
    %450 = vmatprep.mubr.bf16.mxu0 0
    %451 = vmatmul.mubr.bf16.gmra.mrb[0].mxu0 %v376
    %v452 = vpop.f32.mrb[0].mxu0
    %v453 = vadd.f32 0.0, %v452
    %v454 = vpop.f32.mrb[0].mxu0
    %v455 = vadd.f32 0.0, %v454
    %v456 = vpop.f32.mrb[0].mxu0
    %v457 = vpop.f32.mrb[0].mxu0
    %458 = vdwg.mxu0
    %v459 = vadd.f32 %v372, %v412
    %v460 = vadd.f32 %v373, %v414
    %v461 = vadd.f32 %v374, %v453
    %v462 = vadd.f32 %v375, %v455
    %v463 = vtanh.pop %v459
    %v464 = vtanh.pop %v460
    %v465 = vtanh.pop %v461
    %v466 = vtanh.pop %v462
    %v467 = vmul.f32 %v463, 0.5
    %v468 = vadd.f32 %v467, 0.5
    %v469 = vmul.f32 %v464, 0.5
    %v470 = vadd.f32 %v469, 0.5
    %v471 = vmul.f32 %v466, 0.5
    %v472 = vadd.f32 %v471, 0.5
    %v473 = vmul.f32 %v470, %v367
    %v474 = vmul.f32 %v468, %v465
    %v475 = vadd.f32 %v473, %v474
    %v476 = vtanh.pop %v475
    %v477 = vmul.f32 %v472, %v476
    %s478 = scalar_lea.vmem [#allocation8], 8
    %479 = vst [vmem:[%s478] sm:$0xff] %v477
    %s480 = scalar_lea.vmem [#allocation2], 64
    %v481 = vld [vmem:[%s480] sm:$0xff]
    %v482 = vld [vmem:[%s480 + $0x8] sm:$0xff]
    %v483 = vld [vmem:[%s480 + $0x10] sm:$0xff]
    %v484 = vld [vmem:[%s480 + $0x18] sm:$0xff]
    %v485 = vpack.c.bf16 %v477, %v477
    %486 = vmatprep.subr.bf16.mxu0 %v206
    %487 = vmatpush1.bf16.msra.mxu0 %v205
    %488 = vmatprep.subr.bf16.mxu0 %v210
    %489 = vmatpush1.bf16.msra.mxu0 %v209
    %490 = vmatprep.subr.bf16.mxu0 %v214
    %491 = vmatpush1.bf16.msra.mxu0 %v213
    %492 = vmatprep.subr.bf16.mxu0 %v218
    %493 = vmatpush1.bf16.msra.mxu0 %v217
    %494 = vmatprep.subr.bf16.mxu0 %v222
    %495 = vmatpush1.bf16.msra.mxu0 %v221
    %496 = vmatprep.subr.bf16.mxu0 %v226
    %497 = vmatpush1.bf16.msra.mxu0 %v225
    %498 = vmatprep.subr.bf16.mxu0 %v230
    %499 = vmatpush1.bf16.msra.mxu0 %v229
    %500 = vmatprep.subr.bf16.mxu0 %v234
    %501 = vmatpush1.bf16.msra.mxu0 %v233
    %502 = vmatprep.subr.bf16.mxu0 0
    %503 = vmatpush1.bf16.msra.mxu0 0
    %504 = vmatprep.subr.bf16.mxu0 0
    %505 = vmatpush1.bf16.msra.mxu0 0
    %506 = vmatprep.subr.bf16.mxu0 0
    %507 = vmatpush1.bf16.msra.mxu0 0
    %508 = vmatprep.subr.bf16.mxu0 0
    %509 = vmatpush1.bf16.msra.mxu0 0
    %510 = vmatprep.subr.bf16.mxu0 0
    %511 = vmatpush1.bf16.msra.mxu0 0
    %512 = vmatprep.subr.bf16.mxu0 0
    %513 = vmatpush1.bf16.msra.mxu0 0
    %514 = vmatprep.subr.bf16.mxu0 0
    %515 = vmatpush1.bf16.msra.mxu0 0
    %516 = vmatprep.subr.bf16.mxu0 0
    %517 = vmatpush1.bf16.msra.mxu0 0
    %518 = vmatprep.mubr.bf16.mxu0 0
    %519 = vmatmul.mubr.bf16.gmra.mrb[0].mxu0 %v485
    %v520 = vpop.f32.mrb[0].mxu0
    %v521 = vadd.f32 0.0, %v520
    %v522 = vpop.f32.mrb[0].mxu0
    %v523 = vadd.f32 0.0, %v522
    %v524 = vpop.f32.mrb[0].mxu0
    %v525 = vpop.f32.mrb[0].mxu0
    %526 = vdwg.mxu0
    %527 = vmatprep.subr.bf16.mxu0 %v208
    %528 = vmatpush1.bf16.msra.mxu0 %v207
    %529 = vmatprep.subr.bf16.mxu0 %v212
    %530 = vmatpush1.bf16.msra.mxu0 %v211
    %531 = vmatprep.subr.bf16.mxu0 %v216
    %532 = vmatpush1.bf16.msra.mxu0 %v215
    %533 = vmatprep.subr.bf16.mxu0 %v220
    %534 = vmatpush1.bf16.msra.mxu0 %v219
    %535 = vmatprep.subr.bf16.mxu0 %v224
    %536 = vmatpush1.bf16.msra.mxu0 %v223
    %537 = vmatprep.subr.bf16.mxu0 %v228
    %538 = vmatpush1.bf16.msra.mxu0 %v227
    %539 = vmatprep.subr.bf16.mxu0 %v232
    %540 = vmatpush1.bf16.msra.mxu0 %v231
    %541 = vmatprep.subr.bf16.mxu0 %v236
    %542 = vmatpush1.bf16.msra.mxu0 %v235
    %543 = vmatprep.subr.bf16.mxu0 0
    %544 = vmatpush1.bf16.msra.mxu0 0
    %545 = vmatprep.subr.bf16.mxu0 0
    %546 = vmatpush1.bf16.msra.mxu0 0
    %547 = vmatprep.subr.bf16.mxu0 0
    %548 = vmatpush1.bf16.msra.mxu0 0
    %549 = vmatprep.subr.bf16.mxu0 0
    %550 = vmatpush1.bf16.msra.mxu0 0
    %551 = vmatprep.subr.bf16.mxu0 0
    %552 = vmatpush1.bf16.msra.mxu0 0
    %553 = vmatprep.subr.bf16.mxu0 0
    %554 = vmatpush1.bf16.msra.mxu0 0
    %555 = vmatprep.subr.bf16.mxu0 0
    %556 = vmatpush1.bf16.msra.mxu0 0
    %557 = vmatprep.subr.bf16.mxu0 0
    %558 = vmatpush1.bf16.msra.mxu0 0
    %559 = vmatprep.mubr.bf16.mxu0 0
    %560 = vmatmul.mubr.bf16.gmra.mrb[0].mxu0 %v485
    %v561 = vpop.f32.mrb[0].mxu0
    %v562 = vadd.f32 0.0, %v561
    %v563 = vpop.f32.mrb[0].mxu0
    %v564 = vadd.f32 0.0, %v563
    %v565 = vpop.f32.mrb[0].mxu0
    %v566 = vpop.f32.mrb[0].mxu0
    %567 = vdwg.mxu0
    %v568 = vadd.f32 %v481, %v521
    %v569 = vadd.f32 %v482, %v523
    %v570 = vadd.f32 %v483, %v562
    %v571 = vadd.f32 %v484, %v564
    %v572 = vtanh.pop %v568
    %v573 = vtanh.pop %v569
    %v574 = vtanh.pop %v570
    %v575 = vtanh.pop %v571
    %v576 = vmul.f32 %v572, 0.5
    %v577 = vadd.f32 %v576, 0.5
    %v578 = vmul.f32 %v573, 0.5
    %v579 = vadd.f32 %v578, 0.5
    %v580 = vmul.f32 %v575, 0.5
    %v581 = vadd.f32 %v580, 0.5
    %v582 = vmul.f32 %v579, %v475
    %v583 = vmul.f32 %v577, %v574
    %v584 = vadd.f32 %v582, %v583
    %v585 = vtanh.pop %v584
    %v586 = vmul.f32 %v581, %v585
    %s587 = scalar_lea.vmem [#allocation8], 16
    %588 = vst [vmem:[%s587] sm:$0xff] %v586
    %s589 = scalar_lea.vmem [#allocation2], 96
    %v590 = vld [vmem:[%s589] sm:$0xff]
    %v591 = vld [vmem:[%s589 + $0x8] sm:$0xff]
    %v592 = vld [vmem:[%s589 + $0x10] sm:$0xff]
    %v593 = vld [vmem:[%s589 + $0x18] sm:$0xff]
    %v594 = vpack.c.bf16 %v586, %v586
    %595 = vmatprep.subr.bf16.mxu0 %v206
    %596 = vmatpush1.bf16.msra.mxu0 %v205
    %597 = vmatprep.subr.bf16.mxu0 %v210
    %598 = vmatpush1.bf16.msra.mxu0 %v209
    %599 = vmatprep.subr.bf16.mxu0 %v214
    %600 = vmatpush1.bf16.msra.mxu0 %v213
    %601 = vmatprep.subr.bf16.mxu0 %v218
    %602 = vmatpush1.bf16.msra.mxu0 %v217
    %603 = vmatprep.subr.bf16.mxu0 %v222
    %604 = vmatpush1.bf16.msra.mxu0 %v221
    %605 = vmatprep.subr.bf16.mxu0 %v226
    %606 = vmatpush1.bf16.msra.mxu0 %v225
    %607 = vmatprep.subr.bf16.mxu0 %v230
    %608 = vmatpush1.bf16.msra.mxu0 %v229
    %609 = vmatprep.subr.bf16.mxu0 %v234
    %610 = vmatpush1.bf16.msra.mxu0 %v233
    %611 = vmatprep.subr.bf16.mxu0 0
    %612 = vmatpush1.bf16.msra.mxu0 0
    %613 = vmatprep.subr.bf16.mxu0 0
    %614 = vmatpush1.bf16.msra.mxu0 0
    %615 = vmatprep.subr.bf16.mxu0 0
    %616 = vmatpush1.bf16.msra.mxu0 0
    %617 = vmatprep.subr.bf16.mxu0 0
    %618 = vmatpush1.bf16.msra.mxu0 0
    %619 = vmatprep.subr.bf16.mxu0 0
    %620 = vmatpush1.bf16.msra.mxu0 0
    %621 = vmatprep.subr.bf16.mxu0 0
    %622 = vmatpush1.bf16.msra.mxu0 0
    %623 = vmatprep.subr.bf16.mxu0 0
    %624 = vmatpush1.bf16.msra.mxu0 0
    %625 = vmatprep.subr.bf16.mxu0 0
    %626 = vmatpush1.bf16.msra.mxu0 0
    %627 = vmatprep.mubr.bf16.mxu0 0
    %628 = vmatmul.mubr.bf16.gmra.mrb[0].mxu0 %v594
    %v629 = vpop.f32.mrb[0].mxu0
    %v630 = vadd.f32 0.0, %v629
    %v631 = vpop.f32.mrb[0].mxu0
    %v632 = vadd.f32 0.0, %v631
    %v633 = vpop.f32.mrb[0].mxu0
    %v634 = vpop.f32.mrb[0].mxu0
    %635 = vdwg.mxu0
    %636 = vmatprep.subr.bf16.mxu0 %v208
    %637 = vmatpush1.bf16.msra.mxu0 %v207
    %638 = vmatprep.subr.bf16.mxu0 %v212
    %639 = vmatpush1.bf16.msra.mxu0 %v211
    %640 = vmatprep.subr.bf16.mxu0 %v216
    %641 = vmatpush1.bf16.msra.mxu0 %v215
    %642 = vmatprep.subr.bf16.mxu0 %v220
    %643 = vmatpush1.bf16.msra.mxu0 %v219
    %644 = vmatprep.subr.bf16.mxu0 %v224
    %645 = vmatpush1.bf16.msra.mxu0 %v223
    %646 = vmatprep.subr.bf16.mxu0 %v228
    %647 = vmatpush1.bf16.msra.mxu0 %v227
    %648 = vmatprep.subr.bf16.mxu0 %v232
    %649 = vmatpush1.bf16.msra.mxu0 %v231
    %650 = vmatprep.subr.bf16.mxu0 %v236
    %651 = vmatpush1.bf16.msra.mxu0 %v235
    %652 = vmatprep.subr.bf16.mxu0 0
    %653 = vmatpush1.bf16.msra.mxu0 0
    %654 = vmatprep.subr.bf16.mxu0 0
    %655 = vmatpush1.bf16.msra.mxu0 0
    %656 = vmatprep.subr.bf16.mxu0 0
    %657 = vmatpush1.bf16.msra.mxu0 0
    %658 = vmatprep.subr.bf16.mxu0 0
    %659 = vmatpush1.bf16.msra.mxu0 0
    %660 = vmatprep.subr.bf16.mxu0 0
    %661 = vmatpush1.bf16.msra.mxu0 0
    %662 = vmatprep.subr.bf16.mxu0 0
    %663 = vmatpush1.bf16.msra.mxu0 0
    %664 = vmatprep.subr.bf16.mxu0 0
    %665 = vmatpush1.bf16.msra.mxu0 0
    %666 = vmatprep.subr.bf16.mxu0 0
    %667 = vmatpush1.bf16.msra.mxu0 0
    %668 = vmatprep.mubr.bf16.mxu0 0
    %669 = vmatmul.mubr.bf16.gmra.mrb[0].mxu0 %v594
    %v670 = vpop.f32.mrb[0].mxu0
    %v671 = vadd.f32 0.0, %v670
    %v672 = vpop.f32.mrb[0].mxu0
    %v673 = vadd.f32 0.0, %v672
    %v674 = vpop.f32.mrb[0].mxu0
    %v675 = vpop.f32.mrb[0].mxu0
    %676 = vdwg.mxu0
    %v677 = vadd.f32 %v590, %v630
    %v678 = vadd.f32 %v591, %v632
    %v679 = vadd.f32 %v592, %v671
    %v680 = vadd.f32 %v593, %v673
    %v681 = vtanh.pop %v677
    %v682 = vtanh.pop %v678
    %v683 = vtanh.pop %v679
    %v684 = vtanh.pop %v680
    %v685 = vmul.f32 %v681, 0.5
    %v686 = vadd.f32 %v685, 0.5
    %v687 = vmul.f32 %v682, 0.5
    %v688 = vadd.f32 %v687, 0.5
    %v689 = vmul.f32 %v684, 0.5
    %v690 = vadd.f32 %v689, 0.5
    %v691 = vmul.f32 %v688, %v584
    %v692 = vmul.f32 %v686, %v683
    %v693 = vadd.f32 %v691, %v692
    %v694 = vtanh.pop %v693
    %v695 = vmul.f32 %v690, %v694
    %s696 = scalar_lea.vmem [#allocation8], 24
    %697 = vst [vmem:[%s696] sm:$0xff] %v695
    %s698 = scalar_lea.vmem [#allocation2], 128
    %v699 = vld [vmem:[%s698] sm:$0xff]
    %v700 = vld [vmem:[%s698 + $0x8] sm:$0xff]
    %v701 = vld [vmem:[%s698 + $0x10] sm:$0xff]
    %v702 = vld [vmem:[%s698 + $0x18] sm:$0xff]
    %v703 = vpack.c.bf16 %v695, %v695
    %704 = vmatprep.subr.bf16.mxu0 %v206
    %705 = vmatpush1.bf16.msra.mxu0 %v205
    %706 = vmatprep.subr.bf16.mxu0 %v210
    %707 = vmatpush1.bf16.msra.mxu0 %v209
    %708 = vmatprep.subr.bf16.mxu0 %v214
    %709 = vmatpush1.bf16.msra.mxu0 %v213
    %710 = vmatprep.subr.bf16.mxu0 %v218
    %711 = vmatpush1.bf16.msra.mxu0 %v217
    %712 = vmatprep.subr.bf16.mxu0 %v222
    %713 = vmatpush1.bf16.msra.mxu0 %v221
    %714 = vmatprep.subr.bf16.mxu0 %v226
    %715 = vmatpush1.bf16.msra.mxu0 %v225
    %716 = vmatprep.subr.bf16.mxu0 %v230
    %717 = vmatpush1.bf16.msra.mxu0 %v229
    %718 = vmatprep.subr.bf16.mxu0 %v234
    %719 = vmatpush1.bf16.msra.mxu0 %v233
    %720 = vmatprep.subr.bf16.mxu0 0
    %721 = vmatpush1.bf16.msra.mxu0 0
    %722 = vmatprep.subr.bf16.mxu0 0
    %723 = vmatpush1.bf16.msra.mxu0 0
    %724 = vmatprep.subr.bf16.mxu0 0
    %725 = vmatpush1.bf16.msra.mxu0 0
    %726 = vmatprep.subr.bf16.mxu0 0
    %727 = vmatpush1.bf16.msra.mxu0 0
    %728 = vmatprep.subr.bf16.mxu0 0
    %729 = vmatpush1.bf16.msra.mxu0 0
    %730 = vmatprep.subr.bf16.mxu0 0
    %731 = vmatpush1.bf16.msra.mxu0 0
    %732 = vmatprep.subr.bf16.mxu0 0
    %733 = vmatpush1.bf16.msra.mxu0 0
    %734 = vmatprep.subr.bf16.mxu0 0
    %735 = vmatpush1.bf16.msra.mxu0 0
    %736 = vmatprep.mubr.bf16.mxu0 0
    %737 = vmatmul.mubr.bf16.gmra.mrb[0].mxu0 %v703
    %v738 = vpop.f32.mrb[0].mxu0
    %v739 = vadd.f32 0.0, %v738
    %v740 = vpop.f32.mrb[0].mxu0
    %v741 = vadd.f32 0.0, %v740
    %v742 = vpop.f32.mrb[0].mxu0
    %v743 = vpop.f32.mrb[0].mxu0
    %744 = vdwg.mxu0
    %745 = vmatprep.subr.bf16.mxu0 %v208
    %746 = vmatpush1.bf16.msra.mxu0 %v207
    %747 = vmatprep.subr.bf16.mxu0 %v212
    %748 = vmatpush1.bf16.msra.mxu0 %v211
    %749 = vmatprep.subr.bf16.mxu0 %v216
    %750 = vmatpush1.bf16.msra.mxu0 %v215
    %751 = vmatprep.subr.bf16.mxu0 %v220
    %752 = vmatpush1.bf16.msra.mxu0 %v219
    %753 = vmatprep.subr.bf16.mxu0 %v224
    %754 = vmatpush1.bf16.msra.mxu0 %v223
    %755 = vmatprep.subr.bf16.mxu0 %v228
    %756 = vmatpush1.bf16.msra.mxu0 %v227
    %757 = vmatprep.subr.bf16.mxu0 %v232
    %758 = vmatpush1.bf16.msra.mxu0 %v231
    %759 = vmatprep.subr.bf16.mxu0 %v236
    %760 = vmatpush1.bf16.msra.mxu0 %v235
    %761 = vmatprep.subr.bf16.mxu0 0
    %762 = vmatpush1.bf16.msra.mxu0 0
    %763 = vmatprep.subr.bf16.mxu0 0
    %764 = vmatpush1.bf16.msra.mxu0 0
    %765 = vmatprep.subr.bf16.mxu0 0
    %766 = vmatpush1.bf16.msra.mxu0 0
    %767 = vmatprep.subr.bf16.mxu0 0
    %768 = vmatpush1.bf16.msra.mxu0 0
    %769 = vmatprep.subr.bf16.mxu0 0
    %770 = vmatpush1.bf16.msra.mxu0 0
    %771 = vmatprep.subr.bf16.mxu0 0
    %772 = vmatpush1.bf16.msra.mxu0 0
    %773 = vmatprep.subr.bf16.mxu0 0
    %774 = vmatpush1.bf16.msra.mxu0 0
    %775 = vmatprep.subr.bf16.mxu0 0
    %776 = vmatpush1.bf16.msra.mxu0 0
    %777 = vmatprep.mubr.bf16.mxu0 0
    %778 = vmatmul.mubr.bf16.gmra.mrb[0].mxu0 %v703
    %v779 = vpop.f32.mrb[0].mxu0
    %v780 = vadd.f32 0.0, %v779
    %v781 = vpop.f32.mrb[0].mxu0
    %v782 = vadd.f32 0.0, %v781
    %v783 = vpop.f32.mrb[0].mxu0
    %v784 = vpop.f32.mrb[0].mxu0
    %785 = vdwg.mxu0
    %v786 = vadd.f32 %v699, %v739
    %v787 = vadd.f32 %v700, %v741
    %v788 = vadd.f32 %v701, %v780
    %v789 = vadd.f32 %v702, %v782
    %v790 = vtanh.pop %v786
    %v791 = vtanh.pop %v787
    %v792 = vtanh.pop %v788
    %v793 = vtanh.pop %v789
    %v794 = vmul.f32 %v790, 0.5
    %v795 = vadd.f32 %v794, 0.5
    %v796 = vmul.f32 %v791, 0.5
    %v797 = vadd.f32 %v796, 0.5
    %v798 = vmul.f32 %v793, 0.5
    %v799 = vadd.f32 %v798, 0.5
    %v800 = vmul.f32 %v797, %v693
    %v801 = vmul.f32 %v795, %v792
    %v802 = vadd.f32 %v800, %v801
    %v803 = vtanh.pop %v802
    %v804 = vmul.f32 %v799, %v803
    %s805 = scalar_lea.vmem [#allocation8], 32
    %806 = vst [vmem:[%s805] sm:$0xff] %v804
    %s807 = scalar_lea.vmem [#allocation2], 160
    %v808 = vld [vmem:[%s807] sm:$0xff]
    %v809 = vld [vmem:[%s807 + $0x8] sm:$0xff]
    %v810 = vld [vmem:[%s807 + $0x10] sm:$0xff]
    %v811 = vld [vmem:[%s807 + $0x18] sm:$0xff]
    %v812 = vpack.c.bf16 %v804, %v804
    %813 = vmatprep.subr.bf16.mxu0 %v206
    %814 = vmatpush1.bf16.msra.mxu0 %v205
    %815 = vmatprep.subr.bf16.mxu0 %v210
    %816 = vmatpush1.bf16.msra.mxu0 %v209
    %817 = vmatprep.subr.bf16.mxu0 %v214
    %818 = vmatpush1.bf16.msra.mxu0 %v213
    %819 = vmatprep.subr.bf16.mxu0 %v218
    %820 = vmatpush1.bf16.msra.mxu0 %v217
    %821 = vmatprep.subr.bf16.mxu0 %v222
    %822 = vmatpush1.bf16.msra.mxu0 %v221
    %823 = vmatprep.subr.bf16.mxu0 %v226
    %824 = vmatpush1.bf16.msra.mxu0 %v225
    %825 = vmatprep.subr.bf16.mxu0 %v230
    %826 = vmatpush1.bf16.msra.mxu0 %v229
    %827 = vmatprep.subr.bf16.mxu0 %v234
    %828 = vmatpush1.bf16.msra.mxu0 %v233
    %829 = vmatprep.subr.bf16.mxu0 0
    %830 = vmatpush1.bf16.msra.mxu0 0
    %831 = vmatprep.subr.bf16.mxu0 0
    %832 = vmatpush1.bf16.msra.mxu0 0
    %833 = vmatprep.subr.bf16.mxu0 0
    %834 = vmatpush1.bf16.msra.mxu0 0
    %835 = vmatprep.subr.bf16.mxu0 0
    %836 = vmatpush1.bf16.msra.mxu0 0
    %837 = vmatprep.subr.bf16.mxu0 0
    %838 = vmatpush1.bf16.msra.mxu0 0
    %839 = vmatprep.subr.bf16.mxu0 0
    %840 = vmatpush1.bf16.msra.mxu0 0
    %841 = vmatprep.subr.bf16.mxu0 0
    %842 = vmatpush1.bf16.msra.mxu0 0
    %843 = vmatprep.subr.bf16.mxu0 0
    %844 = vmatpush1.bf16.msra.mxu0 0
    %845 = vmatprep.mubr.bf16.mxu0 0
    %846 = vmatmul.mubr.bf16.gmra.mrb[0].mxu0 %v812
    %v847 = vpop.f32.mrb[0].mxu0
    %v848 = vadd.f32 0.0, %v847
    %v849 = vpop.f32.mrb[0].mxu0
    %v850 = vadd.f32 0.0, %v849
    %v851 = vpop.f32.mrb[0].mxu0
    %v852 = vpop.f32.mrb[0].mxu0
    %853 = vdwg.mxu0
    %854 = vmatprep.subr.bf16.mxu0 %v208
    %855 = vmatpush1.bf16.msra.mxu0 %v207
    %856 = vmatprep.subr.bf16.mxu0 %v212
    %857 = vmatpush1.bf16.msra.mxu0 %v211
    %858 = vmatprep.subr.bf16.mxu0 %v216
    %859 = vmatpush1.bf16.msra.mxu0 %v215
    %860 = vmatprep.subr.bf16.mxu0 %v220
    %861 = vmatpush1.bf16.msra.mxu0 %v219
    %862 = vmatprep.subr.bf16.mxu0 %v224
    %863 = vmatpush1.bf16.msra.mxu0 %v223
    %864 = vmatprep.subr.bf16.mxu0 %v228
    %865 = vmatpush1.bf16.msra.mxu0 %v227
    %866 = vmatprep.subr.bf16.mxu0 %v232
    %867 = vmatpush1.bf16.msra.mxu0 %v231
    %868 = vmatprep.subr.bf16.mxu0 %v236
    %869 = vmatpush1.bf16.msra.mxu0 %v235
    %870 = vmatprep.subr.bf16.mxu0 0
    %871 = vmatpush1.bf16.msra.mxu0 0
    %872 = vmatprep.subr.bf16.mxu0 0
    %873 = vmatpush1.bf16.msra.mxu0 0
    %874 = vmatprep.subr.bf16.mxu0 0
    %875 = vmatpush1.bf16.msra.mxu0 0
    %876 = vmatprep.subr.bf16.mxu0 0
    %877 = vmatpush1.bf16.msra.mxu0 0
    %878 = vmatprep.subr.bf16.mxu0 0
    %879 = vmatpush1.bf16.msra.mxu0 0
    %880 = vmatprep.subr.bf16.mxu0 0
    %881 = vmatpush1.bf16.msra.mxu0 0
    %882 = vmatprep.subr.bf16.mxu0 0
    %883 = vmatpush1.bf16.msra.mxu0 0
    %884 = vmatprep.subr.bf16.mxu0 0
    %885 = vmatpush1.bf16.msra.mxu0 0
    %886 = vmatprep.mubr.bf16.mxu0 0
    %887 = vmatmul.mubr.bf16.gmra.mrb[0].mxu0 %v812
    %v888 = vpop.f32.mrb[0].mxu0
    %v889 = vadd.f32 0.0, %v888
    %v890 = vpop.f32.mrb[0].mxu0
    %v891 = vadd.f32 0.0, %v890
    %v892 = vpop.f32.mrb[0].mxu0
    %v893 = vpop.f32.mrb[0].mxu0
    %894 = vdwg.mxu0
    %v895 = vadd.f32 %v808, %v848
    %v896 = vadd.f32 %v809, %v850
    %v897 = vadd.f32 %v810, %v889
    %v898 = vadd.f32 %v811, %v891
    %v899 = vtanh.pop %v895
    %v900 = vtanh.pop %v896
    %v901 = vtanh.pop %v897
    %v902 = vtanh.pop %v898
    %v903 = vmul.f32 %v899, 0.5
    %v904 = vadd.f32 %v903, 0.5
    %v905 = vmul.f32 %v900, 0.5
    %v906 = vadd.f32 %v905, 0.5
    %v907 = vmul.f32 %v902, 0.5
    %v908 = vadd.f32 %v907, 0.5
    %v909 = vmul.f32 %v906, %v802
    %v910 = vmul.f32 %v904, %v901
    %v911 = vadd.f32 %v909, %v910
    %v912 = vtanh.pop %v911
    %v913 = vmul.f32 %v908, %v912
    %s914 = scalar_lea.vmem [#allocation8], 40
    %915 = vst [vmem:[%s914] sm:$0xff] %v913
    %s916 = scalar_lea.vmem [#allocation2], 192
    %v917 = vld [vmem:[%s916] sm:$0xff]
    %v918 = vld [vmem:[%s916 + $0x8] sm:$0xff]
    %v919 = vld [vmem:[%s916 + $0x10] sm:$0xff]
    %v920 = vld [vmem:[%s916 + $0x18] sm:$0xff]
    %v921 = vpack.c.bf16 %v913, %v913
    %922 = vmatprep.subr.bf16.mxu0 %v206
    %923 = vmatpush1.bf16.msra.mxu0 %v205
    %924 = vmatprep.subr.bf16.mxu0 %v210
    %925 = vmatpush1.bf16.msra.mxu0 %v209
    %926 = vmatprep.subr.bf16.mxu0 %v214
    %927 = vmatpush1.bf16.msra.mxu0 %v213
    %928 = vmatprep.subr.bf16.mxu0 %v218
    %929 = vmatpush1.bf16.msra.mxu0 %v217
    %930 = vmatprep.subr.bf16.mxu0 %v222
    %931 = vmatpush1.bf16.msra.mxu0 %v221
    %932 = vmatprep.subr.bf16.mxu0 %v226
    %933 = vmatpush1.bf16.msra.mxu0 %v225
    %934 = vmatprep.subr.bf16.mxu0 %v230
    %935 = vmatpush1.bf16.msra.mxu0 %v229
    %936 = vmatprep.subr.bf16.mxu0 %v234
    %937 = vmatpush1.bf16.msra.mxu0 %v233
    %938 = vmatprep.subr.bf16.mxu0 0
    %939 = vmatpush1.bf16.msra.mxu0 0
    %940 = vmatprep.subr.bf16.mxu0 0
    %941 = vmatpush1.bf16.msra.mxu0 0
    %942 = vmatprep.subr.bf16.mxu0 0
    %943 = vmatpush1.bf16.msra.mxu0 0
    %944 = vmatprep.subr.bf16.mxu0 0
    %945 = vmatpush1.bf16.msra.mxu0 0
    %946 = vmatprep.subr.bf16.mxu0 0
    %947 = vmatpush1.bf16.msra.mxu0 0
    %948 = vmatprep.subr.bf16.mxu0 0
    %949 = vmatpush1.bf16.msra.mxu0 0
    %950 = vmatprep.subr.bf16.mxu0 0
    %951 = vmatpush1.bf16.msra.mxu0 0
    %952 = vmatprep.subr.bf16.mxu0 0
    %953 = vmatpush1.bf16.msra.mxu0 0
    %954 = vmatprep.mubr.bf16.mxu0 0
    %955 = vmatmul.mubr.bf16.gmra.mrb[0].mxu0 %v921
    %v956 = vpop.f32.mrb[0].mxu0
    %v957 = vadd.f32 0.0, %v956
    %v958 = vpop.f32.mrb[0].mxu0
    %v959 = vadd.f32 0.0, %v958
    %v960 = vpop.f32.mrb[0].mxu0
    %v961 = vpop.f32.mrb[0].mxu0
    %962 = vdwg.mxu0
    %963 = vmatprep.subr.bf16.mxu0 %v208
    %964 = vmatpush1.bf16.msra.mxu0 %v207
    %965 = vmatprep.subr.bf16.mxu0 %v212
    %966 = vmatpush1.bf16.msra.mxu0 %v211
    %967 = vmatprep.subr.bf16.mxu0 %v216
    %968 = vmatpush1.bf16.msra.mxu0 %v215
    %969 = vmatprep.subr.bf16.mxu0 %v220
    %970 = vmatpush1.bf16.msra.mxu0 %v219
    %971 = vmatprep.subr.bf16.mxu0 %v224
    %972 = vmatpush1.bf16.msra.mxu0 %v223
    %973 = vmatprep.subr.bf16.mxu0 %v228
    %974 = vmatpush1.bf16.msra.mxu0 %v227
    %975 = vmatprep.subr.bf16.mxu0 %v232
    %976 = vmatpush1.bf16.msra.mxu0 %v231
    %977 = vmatprep.subr.bf16.mxu0 %v236
    %978 = vmatpush1.bf16.msra.mxu0 %v235
    %979 = vmatprep.subr.bf16.mxu0 0
    %980 = vmatpush1.bf16.msra.mxu0 0
    %981 = vmatprep.subr.bf16.mxu0 0
    %982 = vmatpush1.bf16.msra.mxu0 0
    %983 = vmatprep.subr.bf16.mxu0 0
    %984 = vmatpush1.bf16.msra.mxu0 0
    %985 = vmatprep.subr.bf16.mxu0 0
    %986 = vmatpush1.bf16.msra.mxu0 0
    %987 = vmatprep.subr.bf16.mxu0 0
    %988 = vmatpush1.bf16.msra.mxu0 0
    %989 = vmatprep.subr.bf16.mxu0 0
    %990 = vmatpush1.bf16.msra.mxu0 0
    %991 = vmatprep.subr.bf16.mxu0 0
    %992 = vmatpush1.bf16.msra.mxu0 0
    %993 = vmatprep.subr.bf16.mxu0 0
    %994 = vmatpush1.bf16.msra.mxu0 0
    %995 = vmatprep.mubr.bf16.mxu0 0
    %996 = vmatmul.mubr.bf16.gmra.mrb[0].mxu0 %v921
    %v997 = vpop.f32.mrb[0].mxu0
    %v998 = vadd.f32 0.0, %v997
    %v999 = vpop.f32.mrb[0].mxu0
    %v1000 = vadd.f32 0.0, %v999
    %v1001 = vpop.f32.mrb[0].mxu0
    %v1002 = vpop.f32.mrb[0].mxu0
    %1003 = vdwg.mxu0
    %v1004 = vadd.f32 %v917, %v957
    %v1005 = vadd.f32 %v918, %v959
    %v1006 = vadd.f32 %v919, %v998
    %v1007 = vadd.f32 %v920, %v1000
    %v1008 = vtanh.pop %v1004
    %v1009 = vtanh.pop %v1005
    %v1010 = vtanh.pop %v1006
    %v1011 = vtanh.pop %v1007
    %v1012 = vmul.f32 %v1008, 0.5
    %v1013 = vadd.f32 %v1012, 0.5
    %v1014 = vmul.f32 %v1009, 0.5
    %v1015 = vadd.f32 %v1014, 0.5
    %v1016 = vmul.f32 %v1011, 0.5
    %v1017 = vadd.f32 %v1016, 0.5
    %v1018 = vmul.f32 %v1015, %v911
    %v1019 = vmul.f32 %v1013, %v1010
    %v1020 = vadd.f32 %v1018, %v1019
    %v1021 = vtanh.pop %v1020
    %v1022 = vmul.f32 %v1017, %v1021
    %s1023 = scalar_lea.vmem [#allocation8], 48
    %1024 = vst [vmem:[%s1023] sm:$0xff] %v1022
    %s1025 = scalar_lea.vmem [#allocation2], 224
    %v1026 = vld [vmem:[%s1025] sm:$0xff]
    %v1027 = vld [vmem:[%s1025 + $0x8] sm:$0xff]
    %v1028 = vld [vmem:[%s1025 + $0x10] sm:$0xff]
    %v1029 = vld [vmem:[%s1025 + $0x18] sm:$0xff]
    %v1030 = vpack.c.bf16 %v1022, %v1022
    %1031 = vmatprep.subr.bf16.mxu0 %v206
    %1032 = vmatpush1.bf16.msra.mxu0 %v205
    %1033 = vmatprep.subr.bf16.mxu0 %v210
    %1034 = vmatpush1.bf16.msra.mxu0 %v209
    %1035 = vmatprep.subr.bf16.mxu0 %v214
    %1036 = vmatpush1.bf16.msra.mxu0 %v213
    %1037 = vmatprep.subr.bf16.mxu0 %v218
    %1038 = vmatpush1.bf16.msra.mxu0 %v217
    %1039 = vmatprep.subr.bf16.mxu0 %v222
    %1040 = vmatpush1.bf16.msra.mxu0 %v221
    %1041 = vmatprep.subr.bf16.mxu0 %v226
    %1042 = vmatpush1.bf16.msra.mxu0 %v225
    %1043 = vmatprep.subr.bf16.mxu0 %v230
    %1044 = vmatpush1.bf16.msra.mxu0 %v229
    %1045 = vmatprep.subr.bf16.mxu0 %v234
    %1046 = vmatpush1.bf16.msra.mxu0 %v233
    %1047 = vmatprep.subr.bf16.mxu0 0
    %1048 = vmatpush1.bf16.msra.mxu0 0
    %1049 = vmatprep.subr.bf16.mxu0 0
    %1050 = vmatpush1.bf16.msra.mxu0 0
    %1051 = vmatprep.subr.bf16.mxu0 0
    %1052 = vmatpush1.bf16.msra.mxu0 0
    %1053 = vmatprep.subr.bf16.mxu0 0
    %1054 = vmatpush1.bf16.msra.mxu0 0
    %1055 = vmatprep.subr.bf16.mxu0 0
    %1056 = vmatpush1.bf16.msra.mxu0 0
    %1057 = vmatprep.subr.bf16.mxu0 0
    %1058 = vmatpush1.bf16.msra.mxu0 0
    %1059 = vmatprep.subr.bf16.mxu0 0
    %1060 = vmatpush1.bf16.msra.mxu0 0
    %1061 = vmatprep.subr.bf16.mxu0 0
    %1062 = vmatpush1.bf16.msra.mxu0 0
    %1063 = vmatprep.mubr.bf16.mxu0 0
    %1064 = vmatmul.mubr.bf16.gmra.mrb[0].mxu0 %v1030
    %v1065 = vpop.f32.mrb[0].mxu0
    %v1066 = vadd.f32 0.0, %v1065
    %v1067 = vpop.f32.mrb[0].mxu0
    %v1068 = vadd.f32 0.0, %v1067
    %v1069 = vpop.f32.mrb[0].mxu0
    %v1070 = vpop.f32.mrb[0].mxu0
    %1071 = vdwg.mxu0
    %1072 = vmatprep.subr.bf16.mxu0 %v208
    %1073 = vmatpush1.bf16.msra.mxu0 %v207
    %1074 = vmatprep.subr.bf16.mxu0 %v212
    %1075 = vmatpush1.bf16.msra.mxu0 %v211
    %1076 = vmatprep.subr.bf16.mxu0 %v216
    %1077 = vmatpush1.bf16.msra.mxu0 %v215
    %1078 = vmatprep.subr.bf16.mxu0 %v220
    %1079 = vmatpush1.bf16.msra.mxu0 %v219
    %1080 = vmatprep.subr.bf16.mxu0 %v224
    %1081 = vmatpush1.bf16.msra.mxu0 %v223
    %1082 = vmatprep.subr.bf16.mxu0 %v228
    %1083 = vmatpush1.bf16.msra.mxu0 %v227
    %1084 = vmatprep.subr.bf16.mxu0 %v232
    %1085 = vmatpush1.bf16.msra.mxu0 %v231
    %1086 = vmatprep.subr.bf16.mxu0 %v236
    %1087 = vmatpush1.bf16.msra.mxu0 %v235
    %1088 = vmatprep.subr.bf16.mxu0 0
    %1089 = vmatpush1.bf16.msra.mxu0 0
    %1090 = vmatprep.subr.bf16.mxu0 0
    %1091 = vmatpush1.bf16.msra.mxu0 0
    %1092 = vmatprep.subr.bf16.mxu0 0
    %1093 = vmatpush1.bf16.msra.mxu0 0
    %1094 = vmatprep.subr.bf16.mxu0 0
    %1095 = vmatpush1.bf16.msra.mxu0 0
    %1096 = vmatprep.subr.bf16.mxu0 0
    %1097 = vmatpush1.bf16.msra.mxu0 0
    %1098 = vmatprep.subr.bf16.mxu0 0
    %1099 = vmatpush1.bf16.msra.mxu0 0
    %1100 = vmatprep.subr.bf16.mxu0 0
    %1101 = vmatpush1.bf16.msra.mxu0 0
    %1102 = vmatprep.subr.bf16.mxu0 0
    %1103 = vmatpush1.bf16.msra.mxu0 0
    %1104 = vmatprep.mubr.bf16.mxu0 0
    %1105 = vmatmul.mubr.bf16.gmra.mrb[0].mxu0 %v1030
    %v1106 = vpop.f32.mrb[0].mxu0
    %v1107 = vadd.f32 0.0, %v1106
    %v1108 = vpop.f32.mrb[0].mxu0
    %v1109 = vadd.f32 0.0, %v1108
    %v1110 = vpop.f32.mrb[0].mxu0
    %v1111 = vpop.f32.mrb[0].mxu0
    %1112 = vdwg.mxu0
    %v1113 = vadd.f32 %v1026, %v1066
    %v1114 = vadd.f32 %v1027, %v1068
    %v1115 = vadd.f32 %v1028, %v1107
    %v1116 = vadd.f32 %v1029, %v1109
    %v1117 = vtanh.pop %v1113
    %v1118 = vtanh.pop %v1114
    %v1119 = vtanh.pop %v1115
    %v1120 = vtanh.pop %v1116
    %v1121 = vmul.f32 %v1117, 0.5
    %v1122 = vadd.f32 %v1121, 0.5
    %v1123 = vmul.f32 %v1118, 0.5
    %v1124 = vadd.f32 %v1123, 0.5
    %v1125 = vmul.f32 %v1120, 0.5
    %v1126 = vadd.f32 %v1125, 0.5
    %v1127 = vmul.f32 %v1124, %v1020
    %v1128 = vmul.f32 %v1122, %v1119
    %v1129 = vadd.f32 %v1127, %v1128
    %v1130 = vtanh.pop %v1129
    %v1131 = vmul.f32 %v1126, %v1130
    %s1132 = scalar_lea.vmem [#allocation8], 56
    %1133 = vst [vmem:[%s1132] sm:$0xff] %v1131
    %1134 = vst [vmem:[#allocation9] sm:$0xff] %v1131
    %1135 = vst [vmem:[#allocation11] sm:$0xff] %v1129
    // Predicated region
    $region34: #{tpu_custom_call.1} parent=1 // pred_check
      _
    $region35: #{tpu_custom_call.1} parent=1 // pred_check_branch
      %1137 = sbr.rel (0) target = $region37
    $region36: #{tpu_custom_call.1} parent=1 // pred_region
      %s1139 = ssub.s32 1024, 1024
      %1140 = vsyncadd [#allocation4], %s1139
      %s1141 = sshll.u32 [#allocation8], 4
      %s1142 = int_to_ptr.vmem [resolvable:$true] %s1141
      %1147 = dma.vmem_to_hbm [thread:$0]  %s1142, 1024, %s4, [#allocation4], 128, 128, 8
    $region37: #{tpu_custom_call.1} parent=1 // pred_fallthru
      _
    // Predicated region
    $region38: #{tpu_custom_call.1} parent=1 // pred_check
      _
    $region39: #{tpu_custom_call.1} parent=1 // pred_check_branch
      %1149 = sbr.rel (0) target = $region41
    $region40: #{tpu_custom_call.1} parent=1 // pred_region
      %s1151 = ssub.s32 128, 128
      %1152 = vsyncadd [#allocation10], %s1151
      %s1154 = sshll.u32 [#allocation9], 4
      %s1155 = int_to_ptr.vmem [resolvable:$true] %s1154
      %1157 = dma.vmem_to_hbm [thread:$0]  %s1155, 128, %s5, [#allocation10]
    $region41: #{tpu_custom_call.1} parent=1 // pred_fallthru
      _
    // Predicated region
    $region42: #{tpu_custom_call.1} parent=1 // pred_check
      _
    $region43: #{tpu_custom_call.1} parent=1 // pred_check_branch
      %1159 = sbr.rel (0) target = $region45
    $region44: #{tpu_custom_call.1} parent=1 // pred_region
      %s1161 = ssub.s32 128, 128
      %1162 = vsyncadd [#allocation10], %s1161
      %s1164 = sshll.u32 [#allocation11], 4
      %s1165 = int_to_ptr.vmem [resolvable:$true] %s1164
      %1167 = dma.vmem_to_hbm [thread:$0]  %s1165, 128, %s6, [#allocation10]
    $region45: #{tpu_custom_call.1} parent=1 // pred_fallthru
      _
    // Predicated region
    $region46: #{tpu_custom_call.1} parent=1 // pred_check
      _
    $region47: #{tpu_custom_call.1} parent=1 // pred_check_branch
      %1169 = sbr.rel (0) target = $region49
    $region48: #{tpu_custom_call.1} parent=1 // pred_region
      %1170 = dma.done [#allocation4], 1024
    $region49: #{tpu_custom_call.1} parent=1 // pred_fallthru
      _
    // Predicated region
    $region50: #{tpu_custom_call.1} parent=1 // pred_check
      _
    $region51: #{tpu_custom_call.1} parent=1 // pred_check_branch
      %1172 = sbr.rel (0) target = $region53
    $region52: #{tpu_custom_call.1} parent=1 // pred_region
      %1173 = dma.done [#allocation10], 128
    $region53: #{tpu_custom_call.1} parent=1 // pred_fallthru
      _
    // Predicated region
    $region54: #{tpu_custom_call.1} parent=1 // pred_check
      _
    $region55: #{tpu_custom_call.1} parent=1 // pred_check_branch
      %1175 = sbr.rel (0) target = $region57
    $region56: #{tpu_custom_call.1} parent=1 // pred_region
      %1176 = dma.done [#allocation10], 128
    $region57: #{tpu_custom_call.1} parent=1 // pred_fallthru
      _
    %1177 = vsyncpa [#allocation3], 1
    %1178 = vsyncpa [#allocation6], 1
    %1179 = vsyncpa [#allocation4], 1
    %1180 = vsyncpa [#allocation10], 1

</llo_original>
